<compile_context>
chip_gen: v7x
topology: tpu7x:2x2x1
jax: 0.10.0
libtpu: 0.0.40
codegen_flags: <defaults>
</compile_context>

<pallas_src>
import functools

import jax
import jax.numpy as jnp
from jax import lax
from jax.experimental import pallas as pl
from jax.experimental.pallas import tpu as pltpu


def _max2d(x):
    """Full max-reduce of a 2D array, kept as a (1,1) f32 (lowering-safe)."""
    return jnp.max(jnp.max(x, axis=1, keepdims=True), axis=0, keepdims=True)


def _min2d(x):
    """Full min-reduce of a 2D array, kept as a (1,1) f32 (lowering-safe)."""
    return jnp.min(jnp.min(x, axis=1, keepdims=True), axis=0, keepdims=True)


def _range_loss_kernel(feats_ref, inter_ref, intra_ref, total_ref, z_ref, *,
                       ids_per_batch, imgs_per_id, k, margin, alpha, beta):
    """feats_ref: (N, D) f32, ordered p*k batch (K consecutive rows per id).
       inter_ref/intra_ref/total_ref: (1, 1) f32 scalar outputs.
       z_ref: (N+P, D) f32 VMEM scratch holding [samples; class centers]."""
    P, K = ids_per_batch, imgs_per_id
    N = P * K
    M = N + P
    x = feats_ref[...]                                               # (N, D)

    # ---- class centers via ONE (P,N)@(N,D) averaging matmul ---------------
    rp = lax.broadcasted_iota(jnp.int32, (P, N), 0)
    cp = lax.broadcasted_iota(jnp.int32, (P, N), 1)
    in_cls = (cp >= rp * K) & (cp < rp * K + K)
    avg = jnp.where(in_cls, jnp.float32(1.0 / K), jnp.float32(0.0))  # (P, N)
    centers = lax.dot_general(
        avg, x, dimension_numbers=(((1,), (0,)), ((), ())),
        preferred_element_type=jnp.float32)                          # (P, D)

    # ---- assemble z = [x; centers] (both stores tile-aligned: 32 and 8 rows)
    z_ref[0:N, :] = x
    z_ref[N:M, :] = centers
    z = z_ref[...]                                                   # (M, D)

    # ---- ONE fused Gram for samples + centers ------------------------------
    g = lax.dot_general(
        z, z, dimension_numbers=(((1,), (1,)), ((), ())),
        preferred_element_type=jnp.float32)                          # (M, M)

    r = lax.broadcasted_iota(jnp.int32, (M, M), 0)
    c = lax.broadcasted_iota(jnp.int32, (M, M), 1)

    # Squared norms from the Gram diagonal (no transpose needed).
    gdiag = jnp.where(r == c, g, 0.0)
    sq_col = jnp.sum(gdiag, axis=1, keepdims=True)                   # (M, 1)
    sq_row = jnp.sum(gdiag, axis=0, keepdims=True)                   # (1, M)
    d = jnp.sqrt(jnp.maximum(sq_col + sq_row - 2.0 * g, 1e-12))      # (M, M)

    flat = (r * M + c).astype(jnp.float32)
    NEG = jnp.float32(-1e30)
    POS = jnp.float32(1e30)
    BIG_IDX = jnp.float32(M * M)

    # ---- intra-class loss: per-class top-k done in-kernel ------------------
    # sort(K*K block)[-2k::2] == top-k (with multiplicity) of the K(K-1)/2
    # upper-triangle pair distances; iterative max, masking ONE argmax
    # occurrence per step so ties keep their multiplicity.
    intra_total = jnp.zeros((1, 1), jnp.float32)
    for p in range(P):                      # unrolled; elementwise work only
        lo = p * K
        hi = lo + K
        sel = (r >= lo) & (r < hi) & (c >= lo) & (c < hi) & (c > r)
        cur = jnp.where(sel, d, NEG)
        inv_sum = jnp.zeros((1, 1), jnp.float32)
        for t in range(k):
            m = _max2d(cur)                                          # (1, 1)
            inv_sum = inv_sum + 1.0 / m
            if t + 1 < k:
                first = _min2d(jnp.where(cur == m, flat, BIG_IDX))
                cur = jnp.where(flat == first, NEG, cur)
        intra_total = intra_total + jnp.float32(k) / inv_sum

    # ---- inter-class loss: min off-diagonal center distance ----------------
    csel = (r >= N) & (c >= N) & (r != c)
    min_inter = _min2d(jnp.where(csel, d, POS))
    inter_loss = jnp.maximum(jnp.float32(margin) - min_inter, 0.0)

    inter_ref[...] = inter_loss
    intra_ref[...] = intra_total
    total_ref[...] = (jnp.float32(alpha) * intra_total
                      + jnp.float32(beta) * inter_loss)


def _range_loss_pallas(feats, *, ids_per_batch, imgs_per_id, k, margin,
                       alpha, beta):
    """feats: (N, D) f32 -> (inter (1,1), intra (1,1), total (1,1))."""
    N, D = feats.shape
    P = ids_per_batch
    M = N + P
    flops = 2 * P * N * D + 2 * M * M * D
    transcendentals = M * M                       # sqrt count
    bytes_accessed = 4 * (N * D + 3)
    kernel = functools.partial(
        _range_loss_kernel, ids_per_batch=P, imgs_per_id=imgs_per_id,
        k=k, margin=float(margin), alpha=float(alpha), beta=float(beta))
    scalar = jax.ShapeDtypeStruct((1, 1), jnp.float32)
    vmem = pl.BlockSpec(memory_space=pltpu.MemorySpace.VMEM)
    return pl.pallas_call(
        kernel,
        out_shape=(scalar, scalar, scalar),
        in_specs=[vmem],
        out_specs=(vmem, vmem, vmem),
        scratch_shapes=[pltpu.VMEM((M, D), jnp.float32)],
        cost_estimate=pl.CostEstimate(
            flops=flops, transcendentals=transcendentals,
            bytes_accessed=bytes_accessed),
    )(feats)


def range_loss(features, targets, *, k=2, margin=0.1, alpha=0.5, beta=0.5,
               ids_per_batch=8, imgs_per_id=4):
    """Mirrors RangeLoss.forward for the ordered p*k batch case.
    Returns (inter_class_loss, intra_class_loss, range_loss)."""
    N, D = features.shape
    assert N == targets.shape[0], "features.size(0) is not equal to targets.size(0)"
    P, K = ids_per_batch, imgs_per_id
    assert N == P * K, "only the ordered p*k batch layout is implemented"
    assert 2 * k <= K * (K - 1), "k too large for the per-class pair count"
    # TODO(synk): the unordered / targets.unique() path needs a data-dependent
    # number of classes (dynamic shapes) and has no clean static Pallas equivalent.
    feats = features.astype(jnp.float32)
    inter, intra, total = _range_loss_pallas(
        feats, ids_per_batch=P, imgs_per_id=K, k=k, margin=margin,
        alpha=alpha, beta=beta)
    return inter[0, 0], intra[0, 0], total[0, 0]


def _range_loss_reference(features, targets, *, k, margin, alpha, beta,
                          ids_per_batch, imgs_per_id):
    """Pure-JAX reference (same math as the PyTorch module) for a sanity check."""
    P, K = ids_per_batch, imgs_per_id
    D = features.shape[1]

    def pdist(x):
        sq = jnp.sum(x * x, axis=1, keepdims=True)
        d2 = sq + sq.T - 2.0 * (x @ x.T)
        return jnp.sqrt(jnp.maximum(d2, 1e-12))

    feats3 = features.reshape(P, K, D)
    intra_total = 0.0
    for p in range(P):
        d = pdist(feats3[p]).reshape(-1)
        tk = jnp.sort(d)[K * K - 2 * k::2]
        intra_total = intra_total + k / jnp.sum(1.0 / tk)
    centers = jnp.mean(feats3, axis=1)
    min_inter = jnp.sort(pdist(centers).reshape(-1))[P]
    inter = jnp.maximum(jnp.float32(margin) - min_inter, 0.0)
    return inter, intra_total, alpha * intra_total + beta * inter


if __name__ == "__main__":
    # Small shapes consistent with the module: P ids * K imgs per id, feature_dim D.
    P, K, D = 8, 4, 32
    N = P * K
    key = jax.random.PRNGKey(0)
    features = jax.random.normal(key, (N, D), dtype=jnp.float32)
    targets = jnp.repeat(jnp.arange(P, dtype=jnp.int32), K)   # ordered p*k labels

    # margin=0.1 (module default, inter term clamps to 0) and margin=10.0
    # (exercises the in-kernel min-inter / relu path).
    for margin in (0.1, 10.0):
        cfg = dict(k=2, margin=margin, alpha=0.5, beta=0.5,
                   ids_per_batch=P, imgs_per_id=K)
        inter, intra, total = range_loss(features, targets, **cfg)
        jax.block_until_ready(total)

        r_inter, r_intra, r_total = _range_loss_reference(features, targets, **cfg)
        assert jnp.allclose(inter, r_inter, rtol=2e-4, atol=1e-5), (inter, r_inter)
        assert jnp.allclose(intra, r_intra, rtol=2e-4, atol=1e-5), (intra, r_intra)
        assert jnp.allclose(total, r_total, rtol=2e-4, atol=1e-5), (total, r_total)

    print("KERNEL_OK")
</pallas_src>

<mosaic_0001>
module attributes {stable_mosaic.version = 11 : i64} {
  func.func @_range_loss_kernel(%arg0: memref<32x32xf32, #tpu.memory_space<vmem>>, %arg1: memref<1x1xf32, #tpu.memory_space<vmem>>, %arg2: memref<1x1xf32, #tpu.memory_space<vmem>>, %arg3: memref<1x1xf32, #tpu.memory_space<vmem>>, %arg4: memref<40x32xf32, #tpu.memory_space<vmem>>) attributes {dimension_semantics = [], scalar_prefetch = 0 : i64, scratch_operands = 1 : i64, tpu.core_type = #tpu.core_type<tc>} {
    %c0 = arith.constant 0 : index
    %c0_0 = arith.constant 0 : index
    %0 = vector.load %arg0[%c0, %c0_0] : memref<32x32xf32, #tpu.memory_space<vmem>>, vector<32x32xf32>
    %1 = tpu.iota {dimensions = array<i32: 0>} : vector<8x32xi32>
    %2 = tpu.iota {dimensions = array<i32: 1>} : vector<8x32xi32>
    %c4_i32 = arith.constant 4 : i32
    %3 = vector.broadcast %c4_i32 : i32 to vector<8x32xi32>
    %4 = arith.muli %1, %3 : vector<8x32xi32>
    %5 = arith.cmpi sge, %2, %4 : vector<8x32xi32>
    %c4_i32_1 = arith.constant 4 : i32
    %6 = vector.broadcast %c4_i32_1 : i32 to vector<8x32xi32>
    %7 = arith.muli %1, %6 : vector<8x32xi32>
    %c4_i32_2 = arith.constant 4 : i32
    %8 = vector.broadcast %c4_i32_2 : i32 to vector<8x32xi32>
    %9 = arith.addi %7, %8 : vector<8x32xi32>
    %10 = arith.cmpi slt, %2, %9 : vector<8x32xi32>
    %11 = arith.andi %5, %10 : vector<8x32xi1>
    %cst = arith.constant 2.500000e-01 : f32
    %cst_3 = arith.constant 0.000000e+00 : f32
    %12 = vector.broadcast %cst : f32 to vector<8x32xf32>
    %13 = vector.broadcast %cst_3 : f32 to vector<8x32xf32>
    %14 = arith.select %11, %12, %13 : vector<8x32xi1>, vector<8x32xf32>
    %cst_4 = arith.constant dense<0.000000e+00> : vector<8x32xf32>
    %15 = tpu.matmul %14, %0, %cst_4 {dimension_numbers = #tpu.dot_dimension_numbers<[1], [0], [0], [1], [0, 0, 1, 1], [], []>} : vector<8x32xf32>, vector<32x32xf32>, vector<8x32xf32> -> vector<8x32xf32>
    %c0_5 = arith.constant 0 : index
    %c0_6 = arith.constant 0 : index
    %16 = vector.load %arg4[%c0_5, %c0_6] : memref<40x32xf32, #tpu.memory_space<vmem>>, vector<32x32xf32>
    tpu.vector_store %arg4[%c0_5, %c0_6], %0 {strides = array<i32>} : memref<40x32xf32, #tpu.memory_space<vmem>>, vector<32x32xf32>,
    %c32 = arith.constant 32 : index
    %c0_7 = arith.constant 0 : index
    %17 = vector.load %arg4[%c32, %c0_7] : memref<40x32xf32, #tpu.memory_space<vmem>>, vector<8x32xf32>
    tpu.vector_store %arg4[%c32, %c0_7], %15 {strides = array<i32>} : memref<40x32xf32, #tpu.memory_space<vmem>>, vector<8x32xf32>,
    %c0_8 = arith.constant 0 : index
    %c0_9 = arith.constant 0 : index
    %18 = vector.load %arg4[%c0_8, %c0_9] : memref<40x32xf32, #tpu.memory_space<vmem>>, vector<40x32xf32>
    %cst_10 = arith.constant dense<0.000000e+00> : vector<40x40xf32>
    %19 = tpu.matmul %18, %18, %cst_10 {dimension_numbers = #tpu.dot_dimension_numbers<[1], [1], [0], [0], [0, 0, 1, 0], [], []>} : vector<40x32xf32>, vector<40x32xf32>, vector<40x40xf32> -> vector<40x40xf32>
    %20 = tpu.iota {dimensions = array<i32: 0>} : vector<40x40xi32>
    %21 = tpu.iota {dimensions = array<i32: 1>} : vector<40x40xi32>
    %22 = arith.cmpi eq, %20, %21 : vector<40x40xi32>
    %cst_11 = arith.constant 0.000000e+00 : f32
    %23 = vector.broadcast %cst_11 : f32 to vector<40x40xf32>
    %24 = arith.select %22, %19, %23 : vector<40x40xi1>, vector<40x40xf32>
    %cst_12 = arith.constant dense<0.000000e+00> : vector<40xf32>
    %25 = vector.multi_reduction <add>, %24, %cst_12 [1] : vector<40x40xf32> to vector<40xf32>
    %26 = vector.shape_cast %25 : vector<40xf32> to vector<40x1xf32>
    %cst_13 = arith.constant dense<0.000000e+00> : vector<40xf32>
    %27 = vector.multi_reduction <add>, %24, %cst_13 [0] : vector<40x40xf32> to vector<40xf32>
    %28 = vector.shape_cast %27 : vector<40xf32> to vector<1x40xf32>
    %29 = vector.broadcast %26 : vector<40x1xf32> to vector<40x40xf32>
    %30 = vector.broadcast %28 : vector<1x40xf32> to vector<40x40xf32>
    %31 = arith.addf %29, %30 : vector<40x40xf32>
    %cst_14 = arith.constant 2.000000e+00 : f32
    %32 = vector.broadcast %cst_14 : f32 to vector<40x40xf32>
    %33 = arith.mulf %32, %19 : vector<40x40xf32>
    %34 = arith.subf %31, %33 : vector<40x40xf32>
    %cst_15 = arith.constant 9.99999996E-13 : f32
    %35 = vector.broadcast %cst_15 : f32 to vector<40x40xf32>
    %36 = arith.maximumf %34, %35 : vector<40x40xf32>
    %37 = math.sqrt %36 : vector<40x40xf32>
    %c40_i32 = arith.constant 40 : i32
    %38 = vector.broadcast %c40_i32 : i32 to vector<40x40xi32>
    %39 = arith.muli %20, %38 : vector<40x40xi32>
    %40 = arith.addi %39, %21 : vector<40x40xi32>
    %41 = arith.sitofp %40 : vector<40x40xi32> to vector<40x40xf32>
    %cst_16 = arith.constant 0.000000e+00 : f32
    %42 = vector.broadcast %cst_16 : f32 to vector<1x1xf32>
    %c0_i32 = arith.constant 0 : i32
    %43 = vector.broadcast %c0_i32 : i32 to vector<40x40xi32>
    %44 = arith.cmpi sge, %20, %43 : vector<40x40xi32>
    %c4_i32_17 = arith.constant 4 : i32
    %45 = vector.broadcast %c4_i32_17 : i32 to vector<40x40xi32>
    %46 = arith.cmpi slt, %20, %45 : vector<40x40xi32>
    %47 = arith.andi %44, %46 : vector<40x40xi1>
    %c0_i32_18 = arith.constant 0 : i32
    %48 = vector.broadcast %c0_i32_18 : i32 to vector<40x40xi32>
    %49 = arith.cmpi sge, %21, %48 : vector<40x40xi32>
    %50 = arith.andi %47, %49 : vector<40x40xi1>
    %c4_i32_19 = arith.constant 4 : i32
    %51 = vector.broadcast %c4_i32_19 : i32 to vector<40x40xi32>
    %52 = arith.cmpi slt, %21, %51 : vector<40x40xi32>
    %53 = arith.andi %50, %52 : vector<40x40xi1>
    %54 = arith.cmpi sgt, %21, %20 : vector<40x40xi32>
    %55 = arith.andi %53, %54 : vector<40x40xi1>
    %cst_20 = arith.constant -1.000000e+30 : f32
    %56 = vector.broadcast %cst_20 : f32 to vector<40x40xf32>
    %57 = arith.select %55, %37, %56 : vector<40x40xi1>, vector<40x40xf32>
    %cst_21 = arith.constant 0.000000e+00 : f32
    %58 = vector.broadcast %cst_21 : f32 to vector<1x1xf32>
    %cst_22 = arith.constant dense<0xFF800000> : vector<40xf32>
    %59 = vector.multi_reduction <maximumf>, %57, %cst_22 [1] : vector<40x40xf32> to vector<40xf32>
    %60 = vector.shape_cast %59 : vector<40xf32> to vector<40x1xf32>
    %cst_23 = arith.constant dense<0xFF800000> : vector<1xf32>
    %61 = vector.multi_reduction <maximumf>, %60, %cst_23 [0] : vector<40x1xf32> to vector<1xf32>
    %62 = vector.shape_cast %61 : vector<1xf32> to vector<1x1xf32>
    %cst_24 = arith.constant 1.000000e+00 : f32
    %63 = vector.broadcast %cst_24 : f32 to vector<1x1xf32>
    %64 = arith.divf %63, %62 : vector<1x1xf32>
    %65 = arith.addf %58, %64 : vector<1x1xf32>
    %66 = vector.broadcast %62 : vector<1x1xf32> to vector<40x40xf32>
    %67 = arith.cmpf oeq, %57, %66 : vector<40x40xf32>
    %cst_25 = arith.constant 1.600000e+03 : f32
    %68 = vector.broadcast %cst_25 : f32 to vector<40x40xf32>
    %69 = arith.select %67, %41, %68 : vector<40x40xi1>, vector<40x40xf32>
    %cst_26 = arith.constant dense<0x7F800000> : vector<40xf32>
    %70 = vector.multi_reduction <minimumf>, %69, %cst_26 [1] : vector<40x40xf32> to vector<40xf32>
    %71 = vector.shape_cast %70 : vector<40xf32> to vector<40x1xf32>
    %cst_27 = arith.constant dense<0x7F800000> : vector<1xf32>
    %72 = vector.multi_reduction <minimumf>, %71, %cst_27 [0] : vector<40x1xf32> to vector<1xf32>
    %73 = vector.shape_cast %72 : vector<1xf32> to vector<1x1xf32>
    %74 = vector.broadcast %73 : vector<1x1xf32> to vector<40x40xf32>
    %75 = arith.cmpf oeq, %41, %74 : vector<40x40xf32>
    %cst_28 = arith.constant -1.000000e+30 : f32
    %76 = vector.broadcast %cst_28 : f32 to vector<40x40xf32>
    %77 = arith.select %75, %76, %57 : vector<40x40xi1>, vector<40x40xf32>
    %cst_29 = arith.constant dense<0xFF800000> : vector<40xf32>
    %78 = vector.multi_reduction <maximumf>, %77, %cst_29 [1] : vector<40x40xf32> to vector<40xf32>
    %79 = vector.shape_cast %78 : vector<40xf32> to vector<40x1xf32>
    %cst_30 = arith.constant dense<0xFF800000> : vector<1xf32>
    %80 = vector.multi_reduction <maximumf>, %79, %cst_30 [0] : vector<40x1xf32> to vector<1xf32>
    %81 = vector.shape_cast %80 : vector<1xf32> to vector<1x1xf32>
    %cst_31 = arith.constant 1.000000e+00 : f32
    %82 = vector.broadcast %cst_31 : f32 to vector<1x1xf32>
    %83 = arith.divf %82, %81 : vector<1x1xf32>
    %84 = arith.addf %65, %83 : vector<1x1xf32>
    %cst_32 = arith.constant 2.000000e+00 : f32
    %85 = vector.broadcast %cst_32 : f32 to vector<1x1xf32>
    %86 = arith.divf %85, %84 : vector<1x1xf32>
    %87 = arith.addf %42, %86 : vector<1x1xf32>
    %c4_i32_33 = arith.constant 4 : i32
    %88 = vector.broadcast %c4_i32_33 : i32 to vector<40x40xi32>
    %89 = arith.cmpi sge, %20, %88 : vector<40x40xi32>
    %c8_i32 = arith.constant 8 : i32
    %90 = vector.broadcast %c8_i32 : i32 to vector<40x40xi32>
    %91 = arith.cmpi slt, %20, %90 : vector<40x40xi32>
    %92 = arith.andi %89, %91 : vector<40x40xi1>
    %c4_i32_34 = arith.constant 4 : i32
    %93 = vector.broadcast %c4_i32_34 : i32 to vector<40x40xi32>
    %94 = arith.cmpi sge, %21, %93 : vector<40x40xi32>
    %95 = arith.andi %92, %94 : vector<40x40xi1>
    %c8_i32_35 = arith.constant 8 : i32
    %96 = vector.broadcast %c8_i32_35 : i32 to vector<40x40xi32>
    %97 = arith.cmpi slt, %21, %96 : vector<40x40xi32>
    %98 = arith.andi %95, %97 : vector<40x40xi1>
    %99 = arith.cmpi sgt, %21, %20 : vector<40x40xi32>
    %100 = arith.andi %98, %99 : vector<40x40xi1>
    %cst_36 = arith.constant -1.000000e+30 : f32
    %101 = vector.broadcast %cst_36 : f32 to vector<40x40xf32>
    %102 = arith.select %100, %37, %101 : vector<40x40xi1>, vector<40x40xf32>
    %cst_37 = arith.constant 0.000000e+00 : f32
    %103 = vector.broadcast %cst_37 : f32 to vector<1x1xf32>
    %cst_38 = arith.constant dense<0xFF800000> : vector<40xf32>
    %104 = vector.multi_reduction <maximumf>, %102, %cst_38 [1] : vector<40x40xf32> to vector<40xf32>
    %105 = vector.shape_cast %104 : vector<40xf32> to vector<40x1xf32>
    %cst_39 = arith.constant dense<0xFF800000> : vector<1xf32>
    %106 = vector.multi_reduction <maximumf>, %105, %cst_39 [0] : vector<40x1xf32> to vector<1xf32>
    %107 = vector.shape_cast %106 : vector<1xf32> to vector<1x1xf32>
    %cst_40 = arith.constant 1.000000e+00 : f32
    %108 = vector.broadcast %cst_40 : f32 to vector<1x1xf32>
    %109 = arith.divf %108, %107 : vector<1x1xf32>
    %110 = arith.addf %103, %109 : vector<1x1xf32>
    %111 = vector.broadcast %107 : vector<1x1xf32> to vector<40x40xf32>
    %112 = arith.cmpf oeq, %102, %111 : vector<40x40xf32>
    %cst_41 = arith.constant 1.600000e+03 : f32
    %113 = vector.broadcast %cst_41 : f32 to vector<40x40xf32>
    %114 = arith.select %112, %41, %113 : vector<40x40xi1>, vector<40x40xf32>
    %cst_42 = arith.constant dense<0x7F800000> : vector<40xf32>
    %115 = vector.multi_reduction <minimumf>, %114, %cst_42 [1] : vector<40x40xf32> to vector<40xf32>
    %116 = vector.shape_cast %115 : vector<40xf32> to vector<40x1xf32>
    %cst_43 = arith.constant dense<0x7F800000> : vector<1xf32>
    %117 = vector.multi_reduction <minimumf>, %116, %cst_43 [0] : vector<40x1xf32> to vector<1xf32>
    %118 = vector.shape_cast %117 : vector<1xf32> to vector<1x1xf32>
    %119 = vector.broadcast %118 : vector<1x1xf32> to vector<40x40xf32>
    %120 = arith.cmpf oeq, %41, %119 : vector<40x40xf32>
    %cst_44 = arith.constant -1.000000e+30 : f32
    %121 = vector.broadcast %cst_44 : f32 to vector<40x40xf32>
    %122 = arith.select %120, %121, %102 : vector<40x40xi1>, vector<40x40xf32>
    %cst_45 = arith.constant dense<0xFF800000> : vector<40xf32>
    %123 = vector.multi_reduction <maximumf>, %122, %cst_45 [1] : vector<40x40xf32> to vector<40xf32>
    %124 = vector.shape_cast %123 : vector<40xf32> to vector<40x1xf32>
    %cst_46 = arith.constant dense<0xFF800000> : vector<1xf32>
    %125 = vector.multi_reduction <maximumf>, %124, %cst_46 [0] : vector<40x1xf32> to vector<1xf32>
    %126 = vector.shape_cast %125 : vector<1xf32> to vector<1x1xf32>
    %cst_47 = arith.constant 1.000000e+00 : f32
    %127 = vector.broadcast %cst_47 : f32 to vector<1x1xf32>
    %128 = arith.divf %127, %126 : vector<1x1xf32>
    %129 = arith.addf %110, %128 : vector<1x1xf32>
    %cst_48 = arith.constant 2.000000e+00 : f32
    %130 = vector.broadcast %cst_48 : f32 to vector<1x1xf32>
    %131 = arith.divf %130, %129 : vector<1x1xf32>
    %132 = arith.addf %87, %131 : vector<1x1xf32>
    %c8_i32_49 = arith.constant 8 : i32
    %133 = vector.broadcast %c8_i32_49 : i32 to vector<40x40xi32>
    %134 = arith.cmpi sge, %20, %133 : vector<40x40xi32>
    %c12_i32 = arith.constant 12 : i32
    %135 = vector.broadcast %c12_i32 : i32 to vector<40x40xi32>
    %136 = arith.cmpi slt, %20, %135 : vector<40x40xi32>
    %137 = arith.andi %134, %136 : vector<40x40xi1>
    %c8_i32_50 = arith.constant 8 : i32
    %138 = vector.broadcast %c8_i32_50 : i32 to vector<40x40xi32>
    %139 = arith.cmpi sge, %21, %138 : vector<40x40xi32>
    %140 = arith.andi %137, %139 : vector<40x40xi1>
    %c12_i32_51 = arith.constant 12 : i32
    %141 = vector.broadcast %c12_i32_51 : i32 to vector<40x40xi32>
    %142 = arith.cmpi slt, %21, %141 : vector<40x40xi32>
    %143 = arith.andi %140, %142 : vector<40x40xi1>
    %144 = arith.cmpi sgt, %21, %20 : vector<40x40xi32>
    %145 = arith.andi %143, %144 : vector<40x40xi1>
    %cst_52 = arith.constant -1.000000e+30 : f32
    %146 = vector.broadcast %cst_52 : f32 to vector<40x40xf32>
    %147 = arith.select %145, %37, %146 : vector<40x40xi1>, vector<40x40xf32>
    %cst_53 = arith.constant 0.000000e+00 : f32
    %148 = vector.broadcast %cst_53 : f32 to vector<1x1xf32>
    %cst_54 = arith.constant dense<0xFF800000> : vector<40xf32>
    %149 = vector.multi_reduction <maximumf>, %147, %cst_54 [1] : vector<40x40xf32> to vector<40xf32>
    %150 = vector.shape_cast %149 : vector<40xf32> to vector<40x1xf32>
    %cst_55 = arith.constant dense<0xFF800000> : vector<1xf32>
    %151 = vector.multi_reduction <maximumf>, %150, %cst_55 [0] : vector<40x1xf32> to vector<1xf32>
    %152 = vector.shape_cast %151 : vector<1xf32> to vector<1x1xf32>
    %cst_56 = arith.constant 1.000000e+00 : f32
    %153 = vector.broadcast %cst_56 : f32 to vector<1x1xf32>
    %154 = arith.divf %153, %152 : vector<1x1xf32>
    %155 = arith.addf %148, %154 : vector<1x1xf32>
    %156 = vector.broadcast %152 : vector<1x1xf32> to vector<40x40xf32>
    %157 = arith.cmpf oeq, %147, %156 : vector<40x40xf32>
    %cst_57 = arith.constant 1.600000e+03 : f32
    %158 = vector.broadcast %cst_57 : f32 to vector<40x40xf32>
    %159 = arith.select %157, %41, %158 : vector<40x40xi1>, vector<40x40xf32>
    %cst_58 = arith.constant dense<0x7F800000> : vector<40xf32>
    %160 = vector.multi_reduction <minimumf>, %159, %cst_58 [1] : vector<40x40xf32> to vector<40xf32>
    %161 = vector.shape_cast %160 : vector<40xf32> to vector<40x1xf32>
    %cst_59 = arith.constant dense<0x7F800000> : vector<1xf32>
    %162 = vector.multi_reduction <minimumf>, %161, %cst_59 [0] : vector<40x1xf32> to vector<1xf32>
    %163 = vector.shape_cast %162 : vector<1xf32> to vector<1x1xf32>
    %164 = vector.broadcast %163 : vector<1x1xf32> to vector<40x40xf32>
    %165 = arith.cmpf oeq, %41, %164 : vector<40x40xf32>
    %cst_60 = arith.constant -1.000000e+30 : f32
    %166 = vector.broadcast %cst_60 : f32 to vector<40x40xf32>
    %167 = arith.select %165, %166, %147 : vector<40x40xi1>, vector<40x40xf32>
    %cst_61 = arith.constant dense<0xFF800000> : vector<40xf32>
    %168 = vector.multi_reduction <maximumf>, %167, %cst_61 [1] : vector<40x40xf32> to vector<40xf32>
    %169 = vector.shape_cast %168 : vector<40xf32> to vector<40x1xf32>
    %cst_62 = arith.constant dense<0xFF800000> : vector<1xf32>
    %170 = vector.multi_reduction <maximumf>, %169, %cst_62 [0] : vector<40x1xf32> to vector<1xf32>
    %171 = vector.shape_cast %170 : vector<1xf32> to vector<1x1xf32>
    %cst_63 = arith.constant 1.000000e+00 : f32
    %172 = vector.broadcast %cst_63 : f32 to vector<1x1xf32>
    %173 = arith.divf %172, %171 : vector<1x1xf32>
    %174 = arith.addf %155, %173 : vector<1x1xf32>
    %cst_64 = arith.constant 2.000000e+00 : f32
    %175 = vector.broadcast %cst_64 : f32 to vector<1x1xf32>
    %176 = arith.divf %175, %174 : vector<1x1xf32>
    %177 = arith.addf %132, %176 : vector<1x1xf32>
    %c12_i32_65 = arith.constant 12 : i32
    %178 = vector.broadcast %c12_i32_65 : i32 to vector<40x40xi32>
    %179 = arith.cmpi sge, %20, %178 : vector<40x40xi32>
    %c16_i32 = arith.constant 16 : i32
    %180 = vector.broadcast %c16_i32 : i32 to vector<40x40xi32>
    %181 = arith.cmpi slt, %20, %180 : vector<40x40xi32>
    %182 = arith.andi %179, %181 : vector<40x40xi1>
    %c12_i32_66 = arith.constant 12 : i32
    %183 = vector.broadcast %c12_i32_66 : i32 to vector<40x40xi32>
    %184 = arith.cmpi sge, %21, %183 : vector<40x40xi32>
    %185 = arith.andi %182, %184 : vector<40x40xi1>
    %c16_i32_67 = arith.constant 16 : i32
    %186 = vector.broadcast %c16_i32_67 : i32 to vector<40x40xi32>
    %187 = arith.cmpi slt, %21, %186 : vector<40x40xi32>
    %188 = arith.andi %185, %187 : vector<40x40xi1>
    %189 = arith.cmpi sgt, %21, %20 : vector<40x40xi32>
    %190 = arith.andi %188, %189 : vector<40x40xi1>
    %cst_68 = arith.constant -1.000000e+30 : f32
    %191 = vector.broadcast %cst_68 : f32 to vector<40x40xf32>
    %192 = arith.select %190, %37, %191 : vector<40x40xi1>, vector<40x40xf32>
    %cst_69 = arith.constant 0.000000e+00 : f32
    %193 = vector.broadcast %cst_69 : f32 to vector<1x1xf32>
    %cst_70 = arith.constant dense<0xFF800000> : vector<40xf32>
    %194 = vector.multi_reduction <maximumf>, %192, %cst_70 [1] : vector<40x40xf32> to vector<40xf32>
    %195 = vector.shape_cast %194 : vector<40xf32> to vector<40x1xf32>
    %cst_71 = arith.constant dense<0xFF800000> : vector<1xf32>
    %196 = vector.multi_reduction <maximumf>, %195, %cst_71 [0] : vector<40x1xf32> to vector<1xf32>
    %197 = vector.shape_cast %196 : vector<1xf32> to vector<1x1xf32>
    %cst_72 = arith.constant 1.000000e+00 : f32
    %198 = vector.broadcast %cst_72 : f32 to vector<1x1xf32>
    %199 = arith.divf %198, %197 : vector<1x1xf32>
    %200 = arith.addf %193, %199 : vector<1x1xf32>
    %201 = vector.broadcast %197 : vector<1x1xf32> to vector<40x40xf32>
    %202 = arith.cmpf oeq, %192, %201 : vector<40x40xf32>
    %cst_73 = arith.constant 1.600000e+03 : f32
    %203 = vector.broadcast %cst_73 : f32 to vector<40x40xf32>
    %204 = arith.select %202, %41, %203 : vector<40x40xi1>, vector<40x40xf32>
    %cst_74 = arith.constant dense<0x7F800000> : vector<40xf32>
    %205 = vector.multi_reduction <minimumf>, %204, %cst_74 [1] : vector<40x40xf32> to vector<40xf32>
    %206 = vector.shape_cast %205 : vector<40xf32> to vector<40x1xf32>
    %cst_75 = arith.constant dense<0x7F800000> : vector<1xf32>
    %207 = vector.multi_reduction <minimumf>, %206, %cst_75 [0] : vector<40x1xf32> to vector<1xf32>
    %208 = vector.shape_cast %207 : vector<1xf32> to vector<1x1xf32>
    %209 = vector.broadcast %208 : vector<1x1xf32> to vector<40x40xf32>
    %210 = arith.cmpf oeq, %41, %209 : vector<40x40xf32>
    %cst_76 = arith.constant -1.000000e+30 : f32
    %211 = vector.broadcast %cst_76 : f32 to vector<40x40xf32>
    %212 = arith.select %210, %211, %192 : vector<40x40xi1>, vector<40x40xf32>
    %cst_77 = arith.constant dense<0xFF800000> : vector<40xf32>
    %213 = vector.multi_reduction <maximumf>, %212, %cst_77 [1] : vector<40x40xf32> to vector<40xf32>
    %214 = vector.shape_cast %213 : vector<40xf32> to vector<40x1xf32>
    %cst_78 = arith.constant dense<0xFF800000> : vector<1xf32>
    %215 = vector.multi_reduction <maximumf>, %214, %cst_78 [0] : vector<40x1xf32> to vector<1xf32>
    %216 = vector.shape_cast %215 : vector<1xf32> to vector<1x1xf32>
    %cst_79 = arith.constant 1.000000e+00 : f32
    %217 = vector.broadcast %cst_79 : f32 to vector<1x1xf32>
    %218 = arith.divf %217, %216 : vector<1x1xf32>
    %219 = arith.addf %200, %218 : vector<1x1xf32>
    %cst_80 = arith.constant 2.000000e+00 : f32
    %220 = vector.broadcast %cst_80 : f32 to vector<1x1xf32>
    %221 = arith.divf %220, %219 : vector<1x1xf32>
    %222 = arith.addf %177, %221 : vector<1x1xf32>
    %c16_i32_81 = arith.constant 16 : i32
    %223 = vector.broadcast %c16_i32_81 : i32 to vector<40x40xi32>
    %224 = arith.cmpi sge, %20, %223 : vector<40x40xi32>
    %c20_i32 = arith.constant 20 : i32
    %225 = vector.broadcast %c20_i32 : i32 to vector<40x40xi32>
    %226 = arith.cmpi slt, %20, %225 : vector<40x40xi32>
    %227 = arith.andi %224, %226 : vector<40x40xi1>
    %c16_i32_82 = arith.constant 16 : i32
    %228 = vector.broadcast %c16_i32_82 : i32 to vector<40x40xi32>
    %229 = arith.cmpi sge, %21, %228 : vector<40x40xi32>
    %230 = arith.andi %227, %229 : vector<40x40xi1>
    %c20_i32_83 = arith.constant 20 : i32
    %231 = vector.broadcast %c20_i32_83 : i32 to vector<40x40xi32>
    %232 = arith.cmpi slt, %21, %231 : vector<40x40xi32>
    %233 = arith.andi %230, %232 : vector<40x40xi1>
    %234 = arith.cmpi sgt, %21, %20 : vector<40x40xi32>
    %235 = arith.andi %233, %234 : vector<40x40xi1>
    %cst_84 = arith.constant -1.000000e+30 : f32
    %236 = vector.broadcast %cst_84 : f32 to vector<40x40xf32>
    %237 = arith.select %235, %37, %236 : vector<40x40xi1>, vector<40x40xf32>
    %cst_85 = arith.constant 0.000000e+00 : f32
    %238 = vector.broadcast %cst_85 : f32 to vector<1x1xf32>
    %cst_86 = arith.constant dense<0xFF800000> : vector<40xf32>
    %239 = vector.multi_reduction <maximumf>, %237, %cst_86 [1] : vector<40x40xf32> to vector<40xf32>
    %240 = vector.shape_cast %239 : vector<40xf32> to vector<40x1xf32>
    %cst_87 = arith.constant dense<0xFF800000> : vector<1xf32>
    %241 = vector.multi_reduction <maximumf>, %240, %cst_87 [0] : vector<40x1xf32> to vector<1xf32>
    %242 = vector.shape_cast %241 : vector<1xf32> to vector<1x1xf32>
    %cst_88 = arith.constant 1.000000e+00 : f32
    %243 = vector.broadcast %cst_88 : f32 to vector<1x1xf32>
    %244 = arith.divf %243, %242 : vector<1x1xf32>
    %245 = arith.addf %238, %244 : vector<1x1xf32>
    %246 = vector.broadcast %242 : vector<1x1xf32> to vector<40x40xf32>
    %247 = arith.cmpf oeq, %237, %246 : vector<40x40xf32>
    %cst_89 = arith.constant 1.600000e+03 : f32
    %248 = vector.broadcast %cst_89 : f32 to vector<40x40xf32>
    %249 = arith.select %247, %41, %248 : vector<40x40xi1>, vector<40x40xf32>
    %cst_90 = arith.constant dense<0x7F800000> : vector<40xf32>
    %250 = vector.multi_reduction <minimumf>, %249, %cst_90 [1] : vector<40x40xf32> to vector<40xf32>
    %251 = vector.shape_cast %250 : vector<40xf32> to vector<40x1xf32>
    %cst_91 = arith.constant dense<0x7F800000> : vector<1xf32>
    %252 = vector.multi_reduction <minimumf>, %251, %cst_91 [0] : vector<40x1xf32> to vector<1xf32>
    %253 = vector.shape_cast %252 : vector<1xf32> to vector<1x1xf32>
    %254 = vector.broadcast %253 : vector<1x1xf32> to vector<40x40xf32>
    %255 = arith.cmpf oeq, %41, %254 : vector<40x40xf32>
    %cst_92 = arith.constant -1.000000e+30 : f32
    %256 = vector.broadcast %cst_92 : f32 to vector<40x40xf32>
    %257 = arith.select %255, %256, %237 : vector<40x40xi1>, vector<40x40xf32>
    %cst_93 = arith.constant dense<0xFF800000> : vector<40xf32>
    %258 = vector.multi_reduction <maximumf>, %257, %cst_93 [1] : vector<40x40xf32> to vector<40xf32>
    %259 = vector.shape_cast %258 : vector<40xf32> to vector<40x1xf32>
    %cst_94 = arith.constant dense<0xFF800000> : vector<1xf32>
    %260 = vector.multi_reduction <maximumf>, %259, %cst_94 [0] : vector<40x1xf32> to vector<1xf32>
    %261 = vector.shape_cast %260 : vector<1xf32> to vector<1x1xf32>
    %cst_95 = arith.constant 1.000000e+00 : f32
    %262 = vector.broadcast %cst_95 : f32 to vector<1x1xf32>
    %263 = arith.divf %262, %261 : vector<1x1xf32>
    %264 = arith.addf %245, %263 : vector<1x1xf32>
    %cst_96 = arith.constant 2.000000e+00 : f32
    %265 = vector.broadcast %cst_96 : f32 to vector<1x1xf32>
    %266 = arith.divf %265, %264 : vector<1x1xf32>
    %267 = arith.addf %222, %266 : vector<1x1xf32>
    %c20_i32_97 = arith.constant 20 : i32
    %268 = vector.broadcast %c20_i32_97 : i32 to vector<40x40xi32>
    %269 = arith.cmpi sge, %20, %268 : vector<40x40xi32>
    %c24_i32 = arith.constant 24 : i32
    %270 = vector.broadcast %c24_i32 : i32 to vector<40x40xi32>
    %271 = arith.cmpi slt, %20, %270 : vector<40x40xi32>
    %272 = arith.andi %269, %271 : vector<40x40xi1>
    %c20_i32_98 = arith.constant 20 : i32
    %273 = vector.broadcast %c20_i32_98 : i32 to vector<40x40xi32>
    %274 = arith.cmpi sge, %21, %273 : vector<40x40xi32>
    %275 = arith.andi %272, %274 : vector<40x40xi1>
    %c24_i32_99 = arith.constant 24 : i32
    %276 = vector.broadcast %c24_i32_99 : i32 to vector<40x40xi32>
    %277 = arith.cmpi slt, %21, %276 : vector<40x40xi32>
    %278 = arith.andi %275, %277 : vector<40x40xi1>
    %279 = arith.cmpi sgt, %21, %20 : vector<40x40xi32>
    %280 = arith.andi %278, %279 : vector<40x40xi1>
    %cst_100 = arith.constant -1.000000e+30 : f32
    %281 = vector.broadcast %cst_100 : f32 to vector<40x40xf32>
    %282 = arith.select %280, %37, %281 : vector<40x40xi1>, vector<40x40xf32>
    %cst_101 = arith.constant 0.000000e+00 : f32
    %283 = vector.broadcast %cst_101 : f32 to vector<1x1xf32>
    %cst_102 = arith.constant dense<0xFF800000> : vector<40xf32>
    %284 = vector.multi_reduction <maximumf>, %282, %cst_102 [1] : vector<40x40xf32> to vector<40xf32>
    %285 = vector.shape_cast %284 : vector<40xf32> to vector<40x1xf32>
    %cst_103 = arith.constant dense<0xFF800000> : vector<1xf32>
    %286 = vector.multi_reduction <maximumf>, %285, %cst_103 [0] : vector<40x1xf32> to vector<1xf32>
    %287 = vector.shape_cast %286 : vector<1xf32> to vector<1x1xf32>
    %cst_104 = arith.constant 1.000000e+00 : f32
    %288 = vector.broadcast %cst_104 : f32 to vector<1x1xf32>
    %289 = arith.divf %288, %287 : vector<1x1xf32>
    %290 = arith.addf %283, %289 : vector<1x1xf32>
    %291 = vector.broadcast %287 : vector<1x1xf32> to vector<40x40xf32>
    %292 = arith.cmpf oeq, %282, %291 : vector<40x40xf32>
    %cst_105 = arith.constant 1.600000e+03 : f32
    %293 = vector.broadcast %cst_105 : f32 to vector<40x40xf32>
    %294 = arith.select %292, %41, %293 : vector<40x40xi1>, vector<40x40xf32>
    %cst_106 = arith.constant dense<0x7F800000> : vector<40xf32>
    %295 = vector.multi_reduction <minimumf>, %294, %cst_106 [1] : vector<40x40xf32> to vector<40xf32>
    %296 = vector.shape_cast %295 : vector<40xf32> to vector<40x1xf32>
    %cst_107 = arith.constant dense<0x7F800000> : vector<1xf32>
    %297 = vector.multi_reduction <minimumf>, %296, %cst_107 [0] : vector<40x1xf32> to vector<1xf32>
    %298 = vector.shape_cast %297 : vector<1xf32> to vector<1x1xf32>
    %299 = vector.broadcast %298 : vector<1x1xf32> to vector<40x40xf32>
    %300 = arith.cmpf oeq, %41, %299 : vector<40x40xf32>
    %cst_108 = arith.constant -1.000000e+30 : f32
    %301 = vector.broadcast %cst_108 : f32 to vector<40x40xf32>
    %302 = arith.select %300, %301, %282 : vector<40x40xi1>, vector<40x40xf32>
    %cst_109 = arith.constant dense<0xFF800000> : vector<40xf32>
    %303 = vector.multi_reduction <maximumf>, %302, %cst_109 [1] : vector<40x40xf32> to vector<40xf32>
    %304 = vector.shape_cast %303 : vector<40xf32> to vector<40x1xf32>
    %cst_110 = arith.constant dense<0xFF800000> : vector<1xf32>
    %305 = vector.multi_reduction <maximumf>, %304, %cst_110 [0] : vector<40x1xf32> to vector<1xf32>
    %306 = vector.shape_cast %305 : vector<1xf32> to vector<1x1xf32>
    %cst_111 = arith.constant 1.000000e+00 : f32
    %307 = vector.broadcast %cst_111 : f32 to vector<1x1xf32>
    %308 = arith.divf %307, %306 : vector<1x1xf32>
    %309 = arith.addf %290, %308 : vector<1x1xf32>
    %cst_112 = arith.constant 2.000000e+00 : f32
    %310 = vector.broadcast %cst_112 : f32 to vector<1x1xf32>
    %311 = arith.divf %310, %309 : vector<1x1xf32>
    %312 = arith.addf %267, %311 : vector<1x1xf32>
    %c24_i32_113 = arith.constant 24 : i32
    %313 = vector.broadcast %c24_i32_113 : i32 to vector<40x40xi32>
    %314 = arith.cmpi sge, %20, %313 : vector<40x40xi32>
    %c28_i32 = arith.constant 28 : i32
    %315 = vector.broadcast %c28_i32 : i32 to vector<40x40xi32>
    %316 = arith.cmpi slt, %20, %315 : vector<40x40xi32>
    %317 = arith.andi %314, %316 : vector<40x40xi1>
    %c24_i32_114 = arith.constant 24 : i32
    %318 = vector.broadcast %c24_i32_114 : i32 to vector<40x40xi32>
    %319 = arith.cmpi sge, %21, %318 : vector<40x40xi32>
    %320 = arith.andi %317, %319 : vector<40x40xi1>
    %c28_i32_115 = arith.constant 28 : i32
    %321 = vector.broadcast %c28_i32_115 : i32 to vector<40x40xi32>
    %322 = arith.cmpi slt, %21, %321 : vector<40x40xi32>
    %323 = arith.andi %320, %322 : vector<40x40xi1>
    %324 = arith.cmpi sgt, %21, %20 : vector<40x40xi32>
    %325 = arith.andi %323, %324 : vector<40x40xi1>
    %cst_116 = arith.constant -1.000000e+30 : f32
    %326 = vector.broadcast %cst_116 : f32 to vector<40x40xf32>
    %327 = arith.select %325, %37, %326 : vector<40x40xi1>, vector<40x40xf32>
    %cst_117 = arith.constant 0.000000e+00 : f32
    %328 = vector.broadcast %cst_117 : f32 to vector<1x1xf32>
    %cst_118 = arith.constant dense<0xFF800000> : vector<40xf32>
    %329 = vector.multi_reduction <maximumf>, %327, %cst_118 [1] : vector<40x40xf32> to vector<40xf32>
    %330 = vector.shape_cast %329 : vector<40xf32> to vector<40x1xf32>
    %cst_119 = arith.constant dense<0xFF800000> : vector<1xf32>
    %331 = vector.multi_reduction <maximumf>, %330, %cst_119 [0] : vector<40x1xf32> to vector<1xf32>
    %332 = vector.shape_cast %331 : vector<1xf32> to vector<1x1xf32>
    %cst_120 = arith.constant 1.000000e+00 : f32
    %333 = vector.broadcast %cst_120 : f32 to vector<1x1xf32>
    %334 = arith.divf %333, %332 : vector<1x1xf32>
    %335 = arith.addf %328, %334 : vector<1x1xf32>
    %336 = vector.broadcast %332 : vector<1x1xf32> to vector<40x40xf32>
    %337 = arith.cmpf oeq, %327, %336 : vector<40x40xf32>
    %cst_121 = arith.constant 1.600000e+03 : f32
    %338 = vector.broadcast %cst_121 : f32 to vector<40x40xf32>
    %339 = arith.select %337, %41, %338 : vector<40x40xi1>, vector<40x40xf32>
    %cst_122 = arith.constant dense<0x7F800000> : vector<40xf32>
    %340 = vector.multi_reduction <minimumf>, %339, %cst_122 [1] : vector<40x40xf32> to vector<40xf32>
    %341 = vector.shape_cast %340 : vector<40xf32> to vector<40x1xf32>
    %cst_123 = arith.constant dense<0x7F800000> : vector<1xf32>
    %342 = vector.multi_reduction <minimumf>, %341, %cst_123 [0] : vector<40x1xf32> to vector<1xf32>
    %343 = vector.shape_cast %342 : vector<1xf32> to vector<1x1xf32>
    %344 = vector.broadcast %343 : vector<1x1xf32> to vector<40x40xf32>
    %345 = arith.cmpf oeq, %41, %344 : vector<40x40xf32>
    %cst_124 = arith.constant -1.000000e+30 : f32
    %346 = vector.broadcast %cst_124 : f32 to vector<40x40xf32>
    %347 = arith.select %345, %346, %327 : vector<40x40xi1>, vector<40x40xf32>
    %cst_125 = arith.constant dense<0xFF800000> : vector<40xf32>
    %348 = vector.multi_reduction <maximumf>, %347, %cst_125 [1] : vector<40x40xf32> to vector<40xf32>
    %349 = vector.shape_cast %348 : vector<40xf32> to vector<40x1xf32>
    %cst_126 = arith.constant dense<0xFF800000> : vector<1xf32>
    %350 = vector.multi_reduction <maximumf>, %349, %cst_126 [0] : vector<40x1xf32> to vector<1xf32>
    %351 = vector.shape_cast %350 : vector<1xf32> to vector<1x1xf32>
    %cst_127 = arith.constant 1.000000e+00 : f32
    %352 = vector.broadcast %cst_127 : f32 to vector<1x1xf32>
    %353 = arith.divf %352, %351 : vector<1x1xf32>
    %354 = arith.addf %335, %353 : vector<1x1xf32>
    %cst_128 = arith.constant 2.000000e+00 : f32
    %355 = vector.broadcast %cst_128 : f32 to vector<1x1xf32>
    %356 = arith.divf %355, %354 : vector<1x1xf32>
    %357 = arith.addf %312, %356 : vector<1x1xf32>
    %c28_i32_129 = arith.constant 28 : i32
    %358 = vector.broadcast %c28_i32_129 : i32 to vector<40x40xi32>
    %359 = arith.cmpi sge, %20, %358 : vector<40x40xi32>
    %c32_i32 = arith.constant 32 : i32
    %360 = vector.broadcast %c32_i32 : i32 to vector<40x40xi32>
    %361 = arith.cmpi slt, %20, %360 : vector<40x40xi32>
    %362 = arith.andi %359, %361 : vector<40x40xi1>
    %c28_i32_130 = arith.constant 28 : i32
    %363 = vector.broadcast %c28_i32_130 : i32 to vector<40x40xi32>
    %364 = arith.cmpi sge, %21, %363 : vector<40x40xi32>
    %365 = arith.andi %362, %364 : vector<40x40xi1>
    %c32_i32_131 = arith.constant 32 : i32
    %366 = vector.broadcast %c32_i32_131 : i32 to vector<40x40xi32>
    %367 = arith.cmpi slt, %21, %366 : vector<40x40xi32>
    %368 = arith.andi %365, %367 : vector<40x40xi1>
    %369 = arith.cmpi sgt, %21, %20 : vector<40x40xi32>
    %370 = arith.andi %368, %369 : vector<40x40xi1>
    %cst_132 = arith.constant -1.000000e+30 : f32
    %371 = vector.broadcast %cst_132 : f32 to vector<40x40xf32>
    %372 = arith.select %370, %37, %371 : vector<40x40xi1>, vector<40x40xf32>
    %cst_133 = arith.constant 0.000000e+00 : f32
    %373 = vector.broadcast %cst_133 : f32 to vector<1x1xf32>
    %cst_134 = arith.constant dense<0xFF800000> : vector<40xf32>
    %374 = vector.multi_reduction <maximumf>, %372, %cst_134 [1] : vector<40x40xf32> to vector<40xf32>
    %375 = vector.shape_cast %374 : vector<40xf32> to vector<40x1xf32>
    %cst_135 = arith.constant dense<0xFF800000> : vector<1xf32>
    %376 = vector.multi_reduction <maximumf>, %375, %cst_135 [0] : vector<40x1xf32> to vector<1xf32>
    %377 = vector.shape_cast %376 : vector<1xf32> to vector<1x1xf32>
    %cst_136 = arith.constant 1.000000e+00 : f32
    %378 = vector.broadcast %cst_136 : f32 to vector<1x1xf32>
    %379 = arith.divf %378, %377 : vector<1x1xf32>
    %380 = arith.addf %373, %379 : vector<1x1xf32>
    %381 = vector.broadcast %377 : vector<1x1xf32> to vector<40x40xf32>
    %382 = arith.cmpf oeq, %372, %381 : vector<40x40xf32>
    %cst_137 = arith.constant 1.600000e+03 : f32
    %383 = vector.broadcast %cst_137 : f32 to vector<40x40xf32>
    %384 = arith.select %382, %41, %383 : vector<40x40xi1>, vector<40x40xf32>
    %cst_138 = arith.constant dense<0x7F800000> : vector<40xf32>
    %385 = vector.multi_reduction <minimumf>, %384, %cst_138 [1] : vector<40x40xf32> to vector<40xf32>
    %386 = vector.shape_cast %385 : vector<40xf32> to vector<40x1xf32>
    %cst_139 = arith.constant dense<0x7F800000> : vector<1xf32>
    %387 = vector.multi_reduction <minimumf>, %386, %cst_139 [0] : vector<40x1xf32> to vector<1xf32>
    %388 = vector.shape_cast %387 : vector<1xf32> to vector<1x1xf32>
    %389 = vector.broadcast %388 : vector<1x1xf32> to vector<40x40xf32>
    %390 = arith.cmpf oeq, %41, %389 : vector<40x40xf32>
    %cst_140 = arith.constant -1.000000e+30 : f32
    %391 = vector.broadcast %cst_140 : f32 to vector<40x40xf32>
    %392 = arith.select %390, %391, %372 : vector<40x40xi1>, vector<40x40xf32>
    %cst_141 = arith.constant dense<0xFF800000> : vector<40xf32>
    %393 = vector.multi_reduction <maximumf>, %392, %cst_141 [1] : vector<40x40xf32> to vector<40xf32>
    %394 = vector.shape_cast %393 : vector<40xf32> to vector<40x1xf32>
    %cst_142 = arith.constant dense<0xFF800000> : vector<1xf32>
    %395 = vector.multi_reduction <maximumf>, %394, %cst_142 [0] : vector<40x1xf32> to vector<1xf32>
    %396 = vector.shape_cast %395 : vector<1xf32> to vector<1x1xf32>
    %cst_143 = arith.constant 1.000000e+00 : f32
    %397 = vector.broadcast %cst_143 : f32 to vector<1x1xf32>
    %398 = arith.divf %397, %396 : vector<1x1xf32>
    %399 = arith.addf %380, %398 : vector<1x1xf32>
    %cst_144 = arith.constant 2.000000e+00 : f32
    %400 = vector.broadcast %cst_144 : f32 to vector<1x1xf32>
    %401 = arith.divf %400, %399 : vector<1x1xf32>
    %402 = arith.addf %357, %401 : vector<1x1xf32>
    %c32_i32_145 = arith.constant 32 : i32
    %403 = vector.broadcast %c32_i32_145 : i32 to vector<40x40xi32>
    %404 = arith.cmpi sge, %20, %403 : vector<40x40xi32>
    %c32_i32_146 = arith.constant 32 : i32
    %405 = vector.broadcast %c32_i32_146 : i32 to vector<40x40xi32>
    %406 = arith.cmpi sge, %21, %405 : vector<40x40xi32>
    %407 = arith.andi %404, %406 : vector<40x40xi1>
    %408 = arith.cmpi ne, %20, %21 : vector<40x40xi32>
    %409 = arith.andi %407, %408 : vector<40x40xi1>
    %cst_147 = arith.constant 1.000000e+30 : f32
    %410 = vector.broadcast %cst_147 : f32 to vector<40x40xf32>
    %411 = arith.select %409, %37, %410 : vector<40x40xi1>, vector<40x40xf32>
    %cst_148 = arith.constant dense<0x7F800000> : vector<40xf32>
    %412 = vector.multi_reduction <minimumf>, %411, %cst_148 [1] : vector<40x40xf32> to vector<40xf32>
    %413 = vector.shape_cast %412 : vector<40xf32> to vector<40x1xf32>
    %cst_149 = arith.constant dense<0x7F800000> : vector<1xf32>
    %414 = vector.multi_reduction <minimumf>, %413, %cst_149 [0] : vector<40x1xf32> to vector<1xf32>
    %415 = vector.shape_cast %414 : vector<1xf32> to vector<1x1xf32>
    %cst_150 = arith.constant 1.000000e-01 : f32
    %416 = vector.broadcast %cst_150 : f32 to vector<1x1xf32>
    %417 = arith.subf %416, %415 : vector<1x1xf32>
    %cst_151 = arith.constant 0.000000e+00 : f32
    %418 = vector.broadcast %cst_151 : f32 to vector<1x1xf32>
    %419 = arith.maximumf %417, %418 : vector<1x1xf32>
    %c0_152 = arith.constant 0 : index
    %c0_153 = arith.constant 0 : index
    %420 = vector.load %arg1[%c0_152, %c0_153] : memref<1x1xf32, #tpu.memory_space<vmem>>, vector<1x1xf32>
    tpu.vector_store %arg1[%c0_152, %c0_153], %419 {strides = array<i32>} : memref<1x1xf32, #tpu.memory_space<vmem>>, vector<1x1xf32>,
    %c0_154 = arith.constant 0 : index
    %c0_155 = arith.constant 0 : index
    %421 = vector.load %arg2[%c0_154, %c0_155] : memref<1x1xf32, #tpu.memory_space<vmem>>, vector<1x1xf32>
    tpu.vector_store %arg2[%c0_154, %c0_155], %402 {strides = array<i32>} : memref<1x1xf32, #tpu.memory_space<vmem>>, vector<1x1xf32>,
    %cst_156 = arith.constant 5.000000e-01 : f32
    %422 = vector.broadcast %cst_156 : f32 to vector<1x1xf32>
    %423 = arith.mulf %422, %402 : vector<1x1xf32>
    %cst_157 = arith.constant 5.000000e-01 : f32
    %424 = vector.broadcast %cst_157 : f32 to vector<1x1xf32>
    %425 = arith.mulf %424, %419 : vector<1x1xf32>
    %426 = arith.addf %423, %425 : vector<1x1xf32>
    %c0_158 = arith.constant 0 : index
    %c0_159 = arith.constant 0 : index
    %427 = vector.load %arg3[%c0_158, %c0_159] : memref<1x1xf32, #tpu.memory_space<vmem>>, vector<1x1xf32>
    tpu.vector_store %arg3[%c0_158, %c0_159], %426 {strides = array<i32>} : memref<1x1xf32, #tpu.memory_space<vmem>>, vector<1x1xf32>,
    return
  }
}

</mosaic_0001>

<llo_original>
// kernel: tpu_custom_call.1
$region0: #{tpu_custom_call.1}
  #allocation0 [shape = 'u32[]', space=smem, size = 0x4, offset = 0x4, fixed_abs, tag = 'smem constant byte address 0x4 - core index']
  #allocation1 [shape = 'u32[144,128]{1,0:T(1,128)}', space=vmem, size = 0x12000, scoped, tag = 'internal scratch']
  #allocation2 [shape = 'f32[40,32]{1,0:T(8,128)}', space=vmem, size = 0x5000, scoped, tag = 'scratch operand']
  %s0 = inlined_call_operand.hbm [shape: f32[32,32], index: 0, kind: input, shape index: {}]
  %s1 = inlined_call_operand.hbm [shape: f32[1,1], index: 1, kind: output, shape index: {0}]
  %s2 = inlined_call_operand.hbm [shape: f32[1,1], index: 2, kind: output, shape index: {1}]
  %s3 = inlined_call_operand.hbm [shape: f32[1,1], index: 3, kind: output, shape index: {2}]
  %4 = xla_tuple %s1, %s2, %s3
  %s5 = sld [smem:[#allocation0]]
  $region34: #{tpu_custom_call.1} parent=0
    _
  %s7 = ssub.s32 1, %s5
  %s8 = scalar_select 0, %s7, %s5
  $region1: #{tpu_custom_call.1} parent=0
    #allocation3 [shape = 'u8[16384]{0}', space=vmem, size = 0x4000, scoped, tag = 'input window, operand 0, single buffered']
    #allocation4 [shape = 's32[1]{0}', space=sflag, size = 0x4, scoped, tag = 'scoped memory for tpu_custom_call.1']
    #allocation5 [shape = 's32[1]{0}', space=sflag, size = 0x4, scoped, tag = 'scoped memory for tpu_custom_call.1']
    #allocation6 [shape = 'u8[512]{0}', space=vmem, size = 0x400, scoped, tag = 'output window, operand 0, single buffered']
    #allocation7 [shape = 'u8[512]{0}', space=vmem, size = 0x400, scoped, tag = 'output window, operand 1, single buffered']
    #allocation8 [shape = 's32[1]{0}', space=sflag, size = 0x4, scoped, tag = 'scoped memory for tpu_custom_call.1']
    #allocation9 [shape = 'u8[512]{0}', space=vmem, size = 0x400, scoped, tag = 'output window, operand 2, single buffered']
    %9 = vsyncpa [#allocation4], 0
    %10 = vsyncpa [#allocation5], 0
    %11 = vsyncpa [#allocation8], 0
    // Predicated region
    $region2: #{tpu_custom_call.1} parent=1 // pred_check
      _
    $region3: #{tpu_custom_call.1} parent=1 // pred_check_branch
      %13 = sbr.rel (0) target = $region5
    $region4: #{tpu_custom_call.1} parent=1 // pred_region
      %s15 = ssub.s32 512, 512
      %16 = vsyncadd [#allocation4], %s15
      %s17 = sshll.u32 [#allocation3], 4
      %s18 = int_to_ptr.vmem [resolvable:$true] %s17
      %23 = dma.hbm_to_vmem [thread:$0]  %s0, 512, %s18, [#allocation4], 128, 128, 8
    $region5: #{tpu_custom_call.1} parent=1 // pred_fallthru
      _
    // Predicated region
    $region6: #{tpu_custom_call.1} parent=1 // pred_check
      _
    $region7: #{tpu_custom_call.1} parent=1 // pred_check_branch
      %25 = sbr.rel (0) target = $region9
    $region8: #{tpu_custom_call.1} parent=1 // pred_region
      %26 = dma.done [#allocation4], 512
    $region9: #{tpu_custom_call.1} parent=1 // pred_fallthru
      _
    %v27 = vld [vmem:[#allocation3] sm:$0xff]
    %v28 = vld [vmem:[#allocation3 + $0x8] sm:$0xff]
    %v29 = vld [vmem:[#allocation3 + $0x10] sm:$0xff]
    %v30 = vld [vmem:[#allocation3 + $0x18] sm:$0xff]
    %v31 = vlaneseq
    %v32 = vshrl.u32 %v31, 7
    %v33 = vlaneseq
    %v34 = vand.u32 %v33, 127
    %v35 = vmul.u32 %v32, 4
    %vm36 = vcmp.ge.s32.totalorder %v34, %v35
    %v37 = vadd.s32 %v35, 4
    %vm38 = vcmp.lt.s32.totalorder %v34, %v37
    %vm39 = vmand %vm36, %vm38
    %v40 = vsel %vm39, 0.25, 0.0
    %vm41 = vcmask 261120
    %v43 = vsel %vm41, %v40, 0
    %45 = vmatprep.subr.mxu0 0.0
    %46 = vmatpush1.msra.mxu0 %v27
    %47 = vmatprep.subr.mxu0 0.0
    %48 = vmatpush1.msra.mxu0 %v28
    %49 = vmatprep.subr.mxu0 0.0
    %50 = vmatpush1.msra.mxu0 %v29
    %51 = vmatprep.subr.mxu0 0.0
    %52 = vmatpush1.msra.mxu0 %v30
    %53 = vmatprep.subr.mxu0 0.0
    %54 = vmatpush1.msra.mxu0 0.0
    %55 = vmatprep.subr.mxu0 0.0
    %56 = vmatpush1.msra.mxu0 0.0
    %57 = vmatprep.subr.mxu0 0.0
    %58 = vmatpush1.msra.mxu0 0.0
    %59 = vmatprep.subr.mxu0 0.0
    %60 = vmatpush1.msra.mxu0 0.0
    %61 = vmatprep.subr.mxu0 0.0
    %62 = vmatpush1.msra.mxu0 0.0
    %63 = vmatprep.subr.mxu0 0.0
    %64 = vmatpush1.msra.mxu0 0.0
    %65 = vmatprep.subr.mxu0 0.0
    %66 = vmatpush1.msra.mxu0 0.0
    %67 = vmatprep.subr.mxu0 0.0
    %68 = vmatpush1.msra.mxu0 0.0
    %69 = vmatprep.subr.mxu0 0.0
    %70 = vmatpush1.msra.mxu0 0.0
    %71 = vmatprep.subr.mxu0 0.0
    %72 = vmatpush1.msra.mxu0 0.0
    %73 = vmatprep.subr.mxu0 0.0
    %74 = vmatpush1.msra.mxu0 0.0
    %75 = vmatprep.subr.mxu0 0.0
    %76 = vmatpush1.msra.mxu0 0.0
    %77 = vmatprep.subr.mxu0 0.0
    %78 = vmatpush1.msra.mxu0 0.0
    %79 = vmatprep.subr.mxu0 0.0
    %80 = vmatpush1.msra.mxu0 0.0
    %81 = vmatprep.subr.mxu0 0.0
    %82 = vmatpush1.msra.mxu0 0.0
    %83 = vmatprep.subr.mxu0 0.0
    %84 = vmatpush1.msra.mxu0 0.0
    %85 = vmatprep.subr.mxu0 0.0
    %86 = vmatpush1.msra.mxu0 0.0
    %87 = vmatprep.subr.mxu0 0.0
    %88 = vmatpush1.msra.mxu0 0.0
    %89 = vmatprep.subr.mxu0 0.0
    %90 = vmatpush1.msra.mxu0 0.0
    %91 = vmatprep.subr.mxu0 0.0
    %92 = vmatpush1.msra.mxu0 0.0
    %93 = vmatprep.subr.mxu0 0.0
    %94 = vmatpush1.msra.mxu0 0.0
    %95 = vmatprep.subr.mxu0 0.0
    %96 = vmatpush1.msra.mxu0 0.0
    %97 = vmatprep.subr.mxu0 0.0
    %98 = vmatpush1.msra.mxu0 0.0
    %99 = vmatprep.subr.mxu0 0.0
    %100 = vmatpush1.msra.mxu0 0.0
    %101 = vmatprep.subr.mxu0 0.0
    %102 = vmatpush1.msra.mxu0 0.0
    %103 = vmatprep.subr.mxu0 0.0
    %104 = vmatpush1.msra.mxu0 0.0
    %105 = vmatprep.subr.mxu0 0.0
    %106 = vmatpush1.msra.mxu0 0.0
    %107 = vmatprep.subr.mxu0 0.0
    %108 = vmatpush1.msra.mxu0 0.0
    %109 = vmatprep.mubr.f32.mxu0 0.0
    %110 = vmatmul.mubr.f32.gmra.mrb[0].mxu0 %v43
    %v111 = vpop.f32.mrb[0].mxu0
    %v112 = vadd.f32 0.0, %v111
    %v113 = vpop.f32.mrb[0].mxu0
    %114 = vdwg.mxu0
    %115 = vst.msk [vmem:[#allocation2] sm:$0xff] %vm41, %v27
    %116 = vst.msk [vmem:[#allocation2 + $0x8] sm:$0xff] %vm41, %v28
    %117 = vst.msk [vmem:[#allocation2 + $0x10] sm:$0xff] %vm41, %v29
    %118 = vst.msk [vmem:[#allocation2 + $0x18] sm:$0xff] %vm41, %v30
    %119 = vst.msk [vmem:[#allocation2 + $0x20] sm:$0xff] %vm41, %v112
    %v120 = vld [vmem:[#allocation2] sm:$0xff]
    %v121 = vld [vmem:[#allocation2 + $0x8] sm:$0xff]
    %v122 = vld [vmem:[#allocation2 + $0x10] sm:$0xff]
    %v123 = vld [vmem:[#allocation2 + $0x18] sm:$0xff]
    %v124 = vld [vmem:[#allocation2 + $0x20] sm:$0xff]
    %v126 = vsel %vm41, %v120, 0
    %v129 = vsel %vm41, %v121, 0
    %v132 = vsel %vm41, %v122, 0
    %v135 = vsel %vm41, %v123, 0
    %v138 = vsel %vm41, %v124, 0
    %140 = vmatprep.subr.mxu0 0.0
    %141 = vmatpush1.xpose.msra.mxu0 %v126
    %142 = vmatprep.subr.mxu0 0.0
    %143 = vmatpush1.xpose.msra.mxu0 %v129
    %144 = vmatprep.subr.mxu0 0.0
    %145 = vmatpush1.xpose.msra.mxu0 %v132
    %146 = vmatprep.subr.mxu0 0.0
    %147 = vmatpush1.xpose.msra.mxu0 %v135
    %148 = vmatprep.subr.mxu0 0.0
    %149 = vmatpush1.xpose.msra.mxu0 %v138
    %150 = vmatprep.subr.mxu0 0.0
    %151 = vmatpush1.xpose.msra.mxu0 0.0
    %152 = vmatprep.subr.mxu0 0.0
    %153 = vmatpush1.xpose.msra.mxu0 0.0
    %154 = vmatprep.subr.mxu0 0.0
    %155 = vmatpush1.xpose.msra.mxu0 0.0
    %156 = vmatprep.subr.mxu0 0.0
    %157 = vmatpush1.xpose.msra.mxu0 0.0
    %158 = vmatprep.subr.mxu0 0.0
    %159 = vmatpush1.xpose.msra.mxu0 0.0
    %160 = vmatprep.subr.mxu0 0.0
    %161 = vmatpush1.xpose.msra.mxu0 0.0
    %162 = vmatprep.subr.mxu0 0.0
    %163 = vmatpush1.xpose.msra.mxu0 0.0
    %164 = vmatprep.subr.mxu0 0.0
    %165 = vmatpush1.xpose.msra.mxu0 0.0
    %166 = vmatprep.subr.mxu0 0.0
    %167 = vmatpush1.xpose.msra.mxu0 0.0
    %168 = vmatprep.subr.mxu0 0.0
    %169 = vmatpush1.xpose.msra.mxu0 0.0
    %170 = vmatprep.subr.mxu0 0.0
    %171 = vmatpush1.xpose.msra.mxu0 0.0
    %172 = vmatprep.subr.mxu0 0.0
    %173 = vmatpush1.xpose.msra.mxu0 0.0
    %174 = vmatprep.subr.mxu0 0.0
    %175 = vmatpush1.xpose.msra.mxu0 0.0
    %176 = vmatprep.subr.mxu0 0.0
    %177 = vmatpush1.xpose.msra.mxu0 0.0
    %178 = vmatprep.subr.mxu0 0.0
    %179 = vmatpush1.xpose.msra.mxu0 0.0
    %180 = vmatprep.subr.mxu0 0.0
    %181 = vmatpush1.xpose.msra.mxu0 0.0
    %182 = vmatprep.subr.mxu0 0.0
    %183 = vmatpush1.xpose.msra.mxu0 0.0
    %184 = vmatprep.subr.mxu0 0.0
    %185 = vmatpush1.xpose.msra.mxu0 0.0
    %186 = vmatprep.subr.mxu0 0.0
    %187 = vmatpush1.xpose.msra.mxu0 0.0
    %188 = vmatprep.subr.mxu0 0.0
    %189 = vmatpush1.xpose.msra.mxu0 0.0
    %190 = vmatprep.subr.mxu0 0.0
    %191 = vmatpush1.xpose.msra.mxu0 0.0
    %192 = vmatprep.subr.mxu0 0.0
    %193 = vmatpush1.xpose.msra.mxu0 0.0
    %194 = vmatprep.subr.mxu0 0.0
    %195 = vmatpush1.xpose.msra.mxu0 0.0
    %196 = vmatprep.subr.mxu0 0.0
    %197 = vmatpush1.xpose.msra.mxu0 0.0
    %198 = vmatprep.subr.mxu0 0.0
    %199 = vmatpush1.xpose.msra.mxu0 0.0
    %200 = vmatprep.subr.mxu0 0.0
    %201 = vmatpush1.xpose.msra.mxu0 0.0
    %202 = vmatprep.subr.mxu0 0.0
    %203 = vmatpush1.xpose.msra.mxu0 0.0
    %204 = vmatprep.mubr.f32.mxu0 0.0
    %205 = vmatmul.mubr.f32.gmra.mrb[0].mxu0 %v126
    %v206 = vpop.f32.mrb[0].mxu0
    %v207 = vadd.f32 0.0, %v206
    %v208 = vpop.f32.mrb[0].mxu0
    %209 = vmatprep.mubr.f32.mxu0 0.0
    %210 = vmatmul.mubr.f32.gmra.mrb[0].mxu0 %v129
    %v211 = vpop.f32.mrb[0].mxu0
    %v212 = vadd.f32 0.0, %v211
    %v213 = vpop.f32.mrb[0].mxu0
    %214 = vmatprep.mubr.f32.mxu0 0.0
    %215 = vmatmul.mubr.f32.gmra.mrb[0].mxu0 %v132
    %v216 = vpop.f32.mrb[0].mxu0
    %v217 = vadd.f32 0.0, %v216
    %v218 = vpop.f32.mrb[0].mxu0
    %219 = vmatprep.mubr.f32.mxu0 0.0
    %220 = vmatmul.mubr.f32.gmra.mrb[0].mxu0 %v135
    %v221 = vpop.f32.mrb[0].mxu0
    %v222 = vadd.f32 0.0, %v221
    %v223 = vpop.f32.mrb[0].mxu0
    %224 = vmatprep.mubr.f32.mxu0 0.0
    %225 = vmatmul.mubr.f32.gmra.mrb[0].mxu0 %v138
    %v226 = vpop.f32.mrb[0].mxu0
    %v227 = vadd.f32 0.0, %v226
    %v228 = vpop.f32.mrb[0].mxu0
    %229 = vdwg.mxu0
    %v230 = vadd.s32 %v32, 8
    %v231 = vadd.s32 %v32, 16
    %v232 = vadd.s32 %v32, 24
    %v233 = vadd.s32 %v32, 32
    %vm234 = vcmp.eq.s32.totalorder %v32, %v34
    %vm235 = vcmp.eq.s32.totalorder %v230, %v34
    %vm236 = vcmp.eq.s32.totalorder %v231, %v34
    %vm237 = vcmp.eq.s32.totalorder %v232, %v34
    %vm238 = vcmp.eq.s32.totalorder %v233, %v34
    %v239 = vsel %vm234, %v207, 0.0
    %v240 = vsel %vm235, %v212, 0.0
    %v241 = vsel %vm236, %v217, 0.0
    %v242 = vsel %vm237, %v222, 0.0
    %v243 = vsel %vm238, %v227, 0.0
    %vm244 = vcmask 326656
    %v245 = vsel %vm244, %v239, 0.0
    %246 = vadd.xlane.f32.xlu0 %v245
    %v247 = vpop.xlane.xlu0 %246
    %v248 = vsel %vm244, %v240, 0.0
    %249 = vadd.xlane.f32.xlu0 %v248
    %v250 = vpop.xlane.xlu0 %249
    %v251 = vsel %vm244, %v241, 0.0
    %252 = vadd.xlane.f32.xlu0 %v251
    %v253 = vpop.xlane.xlu0 %252
    %v254 = vsel %vm244, %v242, 0.0
    %255 = vadd.xlane.f32.xlu0 %v254
    %v256 = vpop.xlane.xlu0 %255
    %v257 = vsel %vm244, %v243, 0.0
    %258 = vadd.xlane.f32.xlu0 %v257
    %v259 = vpop.xlane.xlu0 %258
    %v260 = vadd.f32 %v245, %v248
    %v261 = vadd.f32 %v260, %v251
    %v262 = vadd.f32 %v261, %v254
    %v263 = vadd.f32 %v262, %v257
    %v264 = vrot.slane %v263, 4
    %v265 = vadd.f32 %v263, %v264
    %v266 = vrot.slane %v265, 2
    %v267 = vadd.f32 %v265, %v266
    %v268 = vrot.slane %v267, 1
    %v269 = vadd.f32 %v267, %v268
    %v270 = vadd.f32 %v247, %v269
    %v271 = vadd.f32 %v250, %v269
    %v272 = vadd.f32 %v253, %v269
    %v273 = vadd.f32 %v256, %v269
    %v274 = vadd.f32 %v259, %v269
    %v275 = vmul.f32 %v207, 2.0
    %v276 = vmul.f32 %v212, 2.0
    %v277 = vmul.f32 %v217, 2.0
    %v278 = vmul.f32 %v222, 2.0
    %v279 = vmul.f32 %v227, 2.0
    %v280 = vsub.f32 %v270, %v275
    %v281 = vsub.f32 %v271, %v276
    %v282 = vsub.f32 %v272, %v277
    %v283 = vsub.f32 %v273, %v278
    %v284 = vsub.f32 %v274, %v279
    %v285 = vmax.f32 %v280, 1e-12
    %v286 = vmax.f32 %v281, 1e-12
    %v287 = vmax.f32 %v282, 1e-12
    %v288 = vmax.f32 %v283, 1e-12
    %v289 = vmax.f32 %v284, 1e-12
    %v290 = vrsqrt.pop %v285
    %v291 = vmul.f32 %v285, %v290
    %vm292 = vcmp.eq.f32.partialorder %v285, inf
    %v293 = vsel %vm292, %v285, %v291
    %vm294 = vcmp.eq.f32.partialorder %v285, 0.0
    %v295 = vand.u32 %v285, 2147483648
    %v296 = vsel %vm294, %v295, %v293
    %v297 = vrsqrt.pop %v286
    %v298 = vmul.f32 %v286, %v297
    %vm299 = vcmp.eq.f32.partialorder %v286, inf
    %v300 = vsel %vm299, %v286, %v298
    %vm301 = vcmp.eq.f32.partialorder %v286, 0.0
    %v302 = vand.u32 %v286, 2147483648
    %v303 = vsel %vm301, %v302, %v300
    %v304 = vrsqrt.pop %v287
    %v305 = vmul.f32 %v287, %v304
    %vm306 = vcmp.eq.f32.partialorder %v287, inf
    %v307 = vsel %vm306, %v287, %v305
    %vm308 = vcmp.eq.f32.partialorder %v287, 0.0
    %v309 = vand.u32 %v287, 2147483648
    %v310 = vsel %vm308, %v309, %v307
    %v311 = vrsqrt.pop %v288
    %v312 = vmul.f32 %v288, %v311
    %vm313 = vcmp.eq.f32.partialorder %v288, inf
    %v314 = vsel %vm313, %v288, %v312
    %vm315 = vcmp.eq.f32.partialorder %v288, 0.0
    %v316 = vand.u32 %v288, 2147483648
    %v317 = vsel %vm315, %v316, %v314
    %v318 = vrsqrt.pop %v289
    %v319 = vmul.f32 %v289, %v318
    %vm320 = vcmp.eq.f32.partialorder %v289, inf
    %v321 = vsel %vm320, %v289, %v319
    %vm322 = vcmp.eq.f32.partialorder %v289, 0.0
    %v323 = vand.u32 %v289, 2147483648
    %v324 = vsel %vm322, %v323, %v321
    %v325 = vmul.u32 %v32, 40
    %v326 = vmul.u32 %v230, 40
    %v327 = vmul.u32 %v231, 40
    %v328 = vmul.u32 %v232, 40
    %v329 = vmul.u32 %v233, 40
    %v330 = vadd.s32 %v325, %v34
    %v331 = vadd.s32 %v326, %v34
    %v332 = vadd.s32 %v327, %v34
    %v333 = vadd.s32 %v328, %v34
    %v334 = vadd.s32 %v329, %v34
    %v335 = vcvt.s32.f32 %v330
    %v336 = vcvt.s32.f32 %v331
    %v337 = vcvt.s32.f32 %v332
    %v338 = vcvt.s32.f32 %v333
    %v339 = vcvt.s32.f32 %v334
    %vm340 = vcmp.ge.s32.totalorder %v32, 0
    %vm341 = vcmp.ge.s32.totalorder %v230, 0
    %vm342 = vcmp.ge.s32.totalorder %v231, 0
    %vm343 = vcmp.ge.s32.totalorder %v232, 0
    %vm344 = vcmp.ge.s32.totalorder %v233, 0
    %vm345 = vcmp.lt.s32.totalorder %v32, 4
    %vm346 = vcmp.lt.s32.totalorder %v230, 4
    %vm347 = vcmp.lt.s32.totalorder %v231, 4
    %vm348 = vcmp.lt.s32.totalorder %v232, 4
    %vm349 = vcmp.lt.s32.totalorder %v233, 4
    %vm350 = vmand %vm340, %vm345
    %vm351 = vmand %vm341, %vm346
    %vm352 = vmand %vm342, %vm347
    %vm353 = vmand %vm343, %vm348
    %vm354 = vmand %vm344, %vm349
    %vm355 = vcmp.ge.s32.totalorder %v34, 0
    %vm356 = vmand %vm350, %vm355
    %vm357 = vmand %vm351, %vm355
    %vm358 = vmand %vm352, %vm355
    %vm359 = vmand %vm353, %vm355
    %vm360 = vmand %vm354, %vm355
    %vm361 = vcmp.lt.s32.totalorder %v34, 4
    %vm362 = vmand %vm356, %vm361
    %vm363 = vmand %vm357, %vm361
    %vm364 = vmand %vm358, %vm361
    %vm365 = vmand %vm359, %vm361
    %vm366 = vmand %vm360, %vm361
    %vm367 = vcmp.gt.s32.totalorder %v34, %v32
    %vm368 = vcmp.gt.s32.totalorder %v34, %v230
    %vm369 = vcmp.gt.s32.totalorder %v34, %v231
    %vm370 = vcmp.gt.s32.totalorder %v34, %v232
    %vm371 = vcmp.gt.s32.totalorder %v34, %v233
    %vm372 = vmand %vm362, %vm367
    %vm373 = vmand %vm363, %vm368
    %vm374 = vmand %vm364, %vm369
    %vm375 = vmand %vm365, %vm370
    %vm376 = vmand %vm366, %vm371
    %v377 = vsel %vm372, %v296, -1e+30
    %v378 = vsel %vm373, %v303, -1e+30
    %v379 = vsel %vm374, %v310, -1e+30
    %v380 = vsel %vm375, %v317, -1e+30
    %v381 = vsel %vm376, %v324, -1e+30
    %v382 = vsel %vm244, %v377, -inf
    %383 = vmax.xlane.f32.xlu0 %v382
    %v384 = vpop.xlane.xlu0 %383
    %v385 = vsel %vm244, %v378, -inf
    %386 = vmax.xlane.f32.xlu0 %v385
    %v387 = vpop.xlane.xlu0 %386
    %v388 = vsel %vm244, %v379, -inf
    %389 = vmax.xlane.f32.xlu0 %v388
    %v390 = vpop.xlane.xlu0 %389
    %v391 = vsel %vm244, %v380, -inf
    %392 = vmax.xlane.f32.xlu0 %v391
    %v393 = vpop.xlane.xlu0 %392
    %v394 = vsel %vm244, %v381, -inf
    %395 = vmax.xlane.f32.xlu0 %v394
    %v396 = vpop.xlane.xlu0 %395
    %v397 = vmax.f32 %v384, %v396
    %v398 = vmax.f32 %v397, %v387
    %v399 = vmax.f32 %v390, %v393
    %v400 = vmax.f32 %v398, %v399
    %v401 = vrot.slane %v400, 4
    %v402 = vmax.f32 %v400, %v401
    %v403 = vrot.slane %v402, 2
    %v404 = vmax.f32 %v402, %v403
    %v405 = vrot.slane %v404, 1
    %v406 = vmax.f32 %v404, %v405
    %v407 = vrcp.pop %v406
    %v408 = vmul.f32 1.0, %v407
    %v409 = vadd.f32 %v408, 0.0
    %vm410 = vcmp.eq.f32.partialorder %v377, %v406
    %vm411 = vcmp.eq.f32.partialorder %v378, %v406
    %vm412 = vcmp.eq.f32.partialorder %v379, %v406
    %vm413 = vcmp.eq.f32.partialorder %v380, %v406
    %vm414 = vcmp.eq.f32.partialorder %v381, %v406
    %v415 = vsel %vm410, %v335, 1600.0
    %v416 = vsel %vm411, %v336, 1600.0
    %v417 = vsel %vm412, %v337, 1600.0
    %v418 = vsel %vm413, %v338, 1600.0
    %v419 = vsel %vm414, %v339, 1600.0
    %v420 = vsel %vm244, %v415, inf
    %421 = vmin.xlane.f32.xlu0 %v420
    %v422 = vpop.xlane.xlu0 %421
    %v423 = vsel %vm244, %v416, inf
    %424 = vmin.xlane.f32.xlu0 %v423
    %v425 = vpop.xlane.xlu0 %424
    %v426 = vsel %vm244, %v417, inf
    %427 = vmin.xlane.f32.xlu0 %v426
    %v428 = vpop.xlane.xlu0 %427
    %v429 = vsel %vm244, %v418, inf
    %430 = vmin.xlane.f32.xlu0 %v429
    %v431 = vpop.xlane.xlu0 %430
    %v432 = vsel %vm244, %v419, inf
    %433 = vmin.xlane.f32.xlu0 %v432
    %v434 = vpop.xlane.xlu0 %433
    %v435 = vmin.f32 %v422, %v434
    %v436 = vmin.f32 %v435, %v425
    %v437 = vmin.f32 %v428, %v431
    %v438 = vmin.f32 %v436, %v437
    %v439 = vrot.slane %v438, 4
    %v440 = vmin.f32 %v438, %v439
    %v441 = vrot.slane %v440, 2
    %v442 = vmin.f32 %v440, %v441
    %v443 = vrot.slane %v442, 1
    %v444 = vmin.f32 %v442, %v443
    %vm445 = vcmp.eq.f32.partialorder %v335, %v444
    %vm446 = vcmp.eq.f32.partialorder %v336, %v444
    %vm447 = vcmp.eq.f32.partialorder %v337, %v444
    %vm448 = vcmp.eq.f32.partialorder %v338, %v444
    %vm449 = vcmp.eq.f32.partialorder %v339, %v444
    %v450 = vsel %vm445, -1e+30, %v377
    %v451 = vsel %vm446, -1e+30, %v378
    %v452 = vsel %vm447, -1e+30, %v379
    %v453 = vsel %vm448, -1e+30, %v380
    %v454 = vsel %vm449, -1e+30, %v381
    %v455 = vsel %vm244, %v450, -inf
    %456 = vmax.xlane.f32.xlu0 %v455
    %v457 = vpop.xlane.xlu0 %456
    %v458 = vsel %vm244, %v451, -inf
    %459 = vmax.xlane.f32.xlu0 %v458
    %v460 = vpop.xlane.xlu0 %459
    %v461 = vsel %vm244, %v452, -inf
    %462 = vmax.xlane.f32.xlu0 %v461
    %v463 = vpop.xlane.xlu0 %462
    %v464 = vsel %vm244, %v453, -inf
    %465 = vmax.xlane.f32.xlu0 %v464
    %v466 = vpop.xlane.xlu0 %465
    %v467 = vsel %vm244, %v454, -inf
    %468 = vmax.xlane.f32.xlu0 %v467
    %v469 = vpop.xlane.xlu0 %468
    %v470 = vmax.f32 %v457, %v469
    %v471 = vmax.f32 %v470, %v460
    %v472 = vmax.f32 %v463, %v466
    %v473 = vmax.f32 %v471, %v472
    %v474 = vrot.slane %v473, 4
    %v475 = vmax.f32 %v473, %v474
    %v476 = vrot.slane %v475, 2
    %v477 = vmax.f32 %v475, %v476
    %v478 = vrot.slane %v477, 1
    %v479 = vmax.f32 %v477, %v478
    %v480 = vrcp.pop %v479
    %v481 = vmul.f32 1.0, %v480
    %v482 = vadd.f32 %v409, %v481
    %v483 = vrcp.pop %v482
    %v484 = vmul.f32 2.0, %v483
    %v485 = vadd.f32 %v484, 0.0
    %vm486 = vcmp.ge.s32.totalorder %v32, 4
    %vm487 = vcmp.ge.s32.totalorder %v230, 4
    %vm488 = vcmp.ge.s32.totalorder %v231, 4
    %vm489 = vcmp.ge.s32.totalorder %v232, 4
    %vm490 = vcmp.ge.s32.totalorder %v233, 4
    %vm491 = vcmp.lt.s32.totalorder %v32, 8
    %vm492 = vcmp.lt.s32.totalorder %v230, 8
    %vm493 = vcmp.lt.s32.totalorder %v231, 8
    %vm494 = vcmp.lt.s32.totalorder %v232, 8
    %vm495 = vcmp.lt.s32.totalorder %v233, 8
    %vm496 = vmand %vm486, %vm491
    %vm497 = vmand %vm487, %vm492
    %vm498 = vmand %vm488, %vm493
    %vm499 = vmand %vm489, %vm494
    %vm500 = vmand %vm490, %vm495
    %vm501 = vcmp.ge.s32.totalorder %v34, 4
    %vm502 = vmand %vm496, %vm501
    %vm503 = vmand %vm497, %vm501
    %vm504 = vmand %vm498, %vm501
    %vm505 = vmand %vm499, %vm501
    %vm506 = vmand %vm500, %vm501
    %vm507 = vcmp.lt.s32.totalorder %v34, 8
    %vm508 = vmand %vm502, %vm507
    %vm509 = vmand %vm503, %vm507
    %vm510 = vmand %vm504, %vm507
    %vm511 = vmand %vm505, %vm507
    %vm512 = vmand %vm506, %vm507
    %vm513 = vmand %vm508, %vm367
    %vm514 = vmand %vm509, %vm368
    %vm515 = vmand %vm510, %vm369
    %vm516 = vmand %vm511, %vm370
    %vm517 = vmand %vm512, %vm371
    %v518 = vsel %vm513, %v296, -1e+30
    %v519 = vsel %vm514, %v303, -1e+30
    %v520 = vsel %vm515, %v310, -1e+30
    %v521 = vsel %vm516, %v317, -1e+30
    %v522 = vsel %vm517, %v324, -1e+30
    %v523 = vsel %vm244, %v518, -inf
    %524 = vmax.xlane.f32.xlu0 %v523
    %v525 = vpop.xlane.xlu0 %524
    %v526 = vsel %vm244, %v519, -inf
    %527 = vmax.xlane.f32.xlu0 %v526
    %v528 = vpop.xlane.xlu0 %527
    %v529 = vsel %vm244, %v520, -inf
    %530 = vmax.xlane.f32.xlu0 %v529
    %v531 = vpop.xlane.xlu0 %530
    %v532 = vsel %vm244, %v521, -inf
    %533 = vmax.xlane.f32.xlu0 %v532
    %v534 = vpop.xlane.xlu0 %533
    %v535 = vsel %vm244, %v522, -inf
    %536 = vmax.xlane.f32.xlu0 %v535
    %v537 = vpop.xlane.xlu0 %536
    %v538 = vmax.f32 %v525, %v537
    %v539 = vmax.f32 %v538, %v528
    %v540 = vmax.f32 %v531, %v534
    %v541 = vmax.f32 %v539, %v540
    %v542 = vrot.slane %v541, 4
    %v543 = vmax.f32 %v541, %v542
    %v544 = vrot.slane %v543, 2
    %v545 = vmax.f32 %v543, %v544
    %v546 = vrot.slane %v545, 1
    %v547 = vmax.f32 %v545, %v546
    %v548 = vrcp.pop %v547
    %v549 = vmul.f32 1.0, %v548
    %v550 = vadd.f32 %v549, 0.0
    %vm551 = vcmp.eq.f32.partialorder %v518, %v547
    %vm552 = vcmp.eq.f32.partialorder %v519, %v547
    %vm553 = vcmp.eq.f32.partialorder %v520, %v547
    %vm554 = vcmp.eq.f32.partialorder %v521, %v547
    %vm555 = vcmp.eq.f32.partialorder %v522, %v547
    %v556 = vsel %vm551, %v335, 1600.0
    %v557 = vsel %vm552, %v336, 1600.0
    %v558 = vsel %vm553, %v337, 1600.0
    %v559 = vsel %vm554, %v338, 1600.0
    %v560 = vsel %vm555, %v339, 1600.0
    %v561 = vsel %vm244, %v556, inf
    %562 = vmin.xlane.f32.xlu0 %v561
    %v563 = vpop.xlane.xlu0 %562
    %v564 = vsel %vm244, %v557, inf
    %565 = vmin.xlane.f32.xlu0 %v564
    %v566 = vpop.xlane.xlu0 %565
    %v567 = vsel %vm244, %v558, inf
    %568 = vmin.xlane.f32.xlu0 %v567
    %v569 = vpop.xlane.xlu0 %568
    %v570 = vsel %vm244, %v559, inf
    %571 = vmin.xlane.f32.xlu0 %v570
    %v572 = vpop.xlane.xlu0 %571
    %v573 = vsel %vm244, %v560, inf
    %574 = vmin.xlane.f32.xlu0 %v573
    %v575 = vpop.xlane.xlu0 %574
    %v576 = vmin.f32 %v563, %v575
    %v577 = vmin.f32 %v576, %v566
    %v578 = vmin.f32 %v569, %v572
    %v579 = vmin.f32 %v577, %v578
    %v580 = vrot.slane %v579, 4
    %v581 = vmin.f32 %v579, %v580
    %v582 = vrot.slane %v581, 2
    %v583 = vmin.f32 %v581, %v582
    %v584 = vrot.slane %v583, 1
    %v585 = vmin.f32 %v583, %v584
    %vm586 = vcmp.eq.f32.partialorder %v335, %v585
    %vm587 = vcmp.eq.f32.partialorder %v336, %v585
    %vm588 = vcmp.eq.f32.partialorder %v337, %v585
    %vm589 = vcmp.eq.f32.partialorder %v338, %v585
    %vm590 = vcmp.eq.f32.partialorder %v339, %v585
    %v591 = vsel %vm586, -1e+30, %v518
    %v592 = vsel %vm587, -1e+30, %v519
    %v593 = vsel %vm588, -1e+30, %v520
    %v594 = vsel %vm589, -1e+30, %v521
    %v595 = vsel %vm590, -1e+30, %v522
    %v596 = vsel %vm244, %v591, -inf
    %597 = vmax.xlane.f32.xlu0 %v596
    %v598 = vpop.xlane.xlu0 %597
    %v599 = vsel %vm244, %v592, -inf
    %600 = vmax.xlane.f32.xlu0 %v599
    %v601 = vpop.xlane.xlu0 %600
    %v602 = vsel %vm244, %v593, -inf
    %603 = vmax.xlane.f32.xlu0 %v602
    %v604 = vpop.xlane.xlu0 %603
    %v605 = vsel %vm244, %v594, -inf
    %606 = vmax.xlane.f32.xlu0 %v605
    %v607 = vpop.xlane.xlu0 %606
    %v608 = vsel %vm244, %v595, -inf
    %609 = vmax.xlane.f32.xlu0 %v608
    %v610 = vpop.xlane.xlu0 %609
    %v611 = vmax.f32 %v598, %v610
    %v612 = vmax.f32 %v611, %v601
    %v613 = vmax.f32 %v604, %v607
    %v614 = vmax.f32 %v612, %v613
    %v615 = vrot.slane %v614, 4
    %v616 = vmax.f32 %v614, %v615
    %v617 = vrot.slane %v616, 2
    %v618 = vmax.f32 %v616, %v617
    %v619 = vrot.slane %v618, 1
    %v620 = vmax.f32 %v618, %v619
    %v621 = vrcp.pop %v620
    %v622 = vmul.f32 1.0, %v621
    %v623 = vadd.f32 %v550, %v622
    %v624 = vrcp.pop %v623
    %v625 = vmul.f32 2.0, %v624
    %v626 = vadd.f32 %v485, %v625
    %vm627 = vcmp.ge.s32.totalorder %v32, 8
    %vm628 = vcmp.ge.s32.totalorder %v230, 8
    %vm629 = vcmp.ge.s32.totalorder %v231, 8
    %vm630 = vcmp.ge.s32.totalorder %v232, 8
    %vm631 = vcmp.ge.s32.totalorder %v233, 8
    %vm632 = vcmp.lt.s32.totalorder %v32, 12
    %vm633 = vcmp.lt.s32.totalorder %v230, 12
    %vm634 = vcmp.lt.s32.totalorder %v231, 12
    %vm635 = vcmp.lt.s32.totalorder %v232, 12
    %vm636 = vcmp.lt.s32.totalorder %v233, 12
    %vm637 = vmand %vm627, %vm632
    %vm638 = vmand %vm628, %vm633
    %vm639 = vmand %vm629, %vm634
    %vm640 = vmand %vm630, %vm635
    %vm641 = vmand %vm631, %vm636
    %vm642 = vcmp.ge.s32.totalorder %v34, 8
    %vm643 = vmand %vm637, %vm642
    %vm644 = vmand %vm638, %vm642
    %vm645 = vmand %vm639, %vm642
    %vm646 = vmand %vm640, %vm642
    %vm647 = vmand %vm641, %vm642
    %vm648 = vcmp.lt.s32.totalorder %v34, 12
    %vm649 = vmand %vm643, %vm648
    %vm650 = vmand %vm644, %vm648
    %vm651 = vmand %vm645, %vm648
    %vm652 = vmand %vm646, %vm648
    %vm653 = vmand %vm647, %vm648
    %vm654 = vmand %vm649, %vm367
    %vm655 = vmand %vm650, %vm368
    %vm656 = vmand %vm651, %vm369
    %vm657 = vmand %vm652, %vm370
    %vm658 = vmand %vm653, %vm371
    %v659 = vsel %vm654, %v296, -1e+30
    %v660 = vsel %vm655, %v303, -1e+30
    %v661 = vsel %vm656, %v310, -1e+30
    %v662 = vsel %vm657, %v317, -1e+30
    %v663 = vsel %vm658, %v324, -1e+30
    %v664 = vsel %vm244, %v659, -inf
    %665 = vmax.xlane.f32.xlu0 %v664
    %v666 = vpop.xlane.xlu0 %665
    %v667 = vsel %vm244, %v660, -inf
    %668 = vmax.xlane.f32.xlu0 %v667
    %v669 = vpop.xlane.xlu0 %668
    %v670 = vsel %vm244, %v661, -inf
    %671 = vmax.xlane.f32.xlu0 %v670
    %v672 = vpop.xlane.xlu0 %671
    %v673 = vsel %vm244, %v662, -inf
    %674 = vmax.xlane.f32.xlu0 %v673
    %v675 = vpop.xlane.xlu0 %674
    %v676 = vsel %vm244, %v663, -inf
    %677 = vmax.xlane.f32.xlu0 %v676
    %v678 = vpop.xlane.xlu0 %677
    %v679 = vmax.f32 %v666, %v678
    %v680 = vmax.f32 %v679, %v669
    %v681 = vmax.f32 %v672, %v675
    %v682 = vmax.f32 %v680, %v681
    %v683 = vrot.slane %v682, 4
    %v684 = vmax.f32 %v682, %v683
    %v685 = vrot.slane %v684, 2
    %v686 = vmax.f32 %v684, %v685
    %v687 = vrot.slane %v686, 1
    %v688 = vmax.f32 %v686, %v687
    %v689 = vrcp.pop %v688
    %v690 = vmul.f32 1.0, %v689
    %v691 = vadd.f32 %v690, 0.0
    %vm692 = vcmp.eq.f32.partialorder %v659, %v688
    %vm693 = vcmp.eq.f32.partialorder %v660, %v688
    %vm694 = vcmp.eq.f32.partialorder %v661, %v688
    %vm695 = vcmp.eq.f32.partialorder %v662, %v688
    %vm696 = vcmp.eq.f32.partialorder %v663, %v688
    %v697 = vsel %vm692, %v335, 1600.0
    %v698 = vsel %vm693, %v336, 1600.0
    %v699 = vsel %vm694, %v337, 1600.0
    %v700 = vsel %vm695, %v338, 1600.0
    %v701 = vsel %vm696, %v339, 1600.0
    %v702 = vsel %vm244, %v697, inf
    %703 = vmin.xlane.f32.xlu0 %v702
    %v704 = vpop.xlane.xlu0 %703
    %v705 = vsel %vm244, %v698, inf
    %706 = vmin.xlane.f32.xlu0 %v705
    %v707 = vpop.xlane.xlu0 %706
    %v708 = vsel %vm244, %v699, inf
    %709 = vmin.xlane.f32.xlu0 %v708
    %v710 = vpop.xlane.xlu0 %709
    %v711 = vsel %vm244, %v700, inf
    %712 = vmin.xlane.f32.xlu0 %v711
    %v713 = vpop.xlane.xlu0 %712
    %v714 = vsel %vm244, %v701, inf
    %715 = vmin.xlane.f32.xlu0 %v714
    %v716 = vpop.xlane.xlu0 %715
    %v717 = vmin.f32 %v704, %v716
    %v718 = vmin.f32 %v717, %v707
    %v719 = vmin.f32 %v710, %v713
    %v720 = vmin.f32 %v718, %v719
    %v721 = vrot.slane %v720, 4
    %v722 = vmin.f32 %v720, %v721
    %v723 = vrot.slane %v722, 2
    %v724 = vmin.f32 %v722, %v723
    %v725 = vrot.slane %v724, 1
    %v726 = vmin.f32 %v724, %v725
    %vm727 = vcmp.eq.f32.partialorder %v335, %v726
    %vm728 = vcmp.eq.f32.partialorder %v336, %v726
    %vm729 = vcmp.eq.f32.partialorder %v337, %v726
    %vm730 = vcmp.eq.f32.partialorder %v338, %v726
    %vm731 = vcmp.eq.f32.partialorder %v339, %v726
    %v732 = vsel %vm727, -1e+30, %v659
    %v733 = vsel %vm728, -1e+30, %v660
    %v734 = vsel %vm729, -1e+30, %v661
    %v735 = vsel %vm730, -1e+30, %v662
    %v736 = vsel %vm731, -1e+30, %v663
    %v737 = vsel %vm244, %v732, -inf
    %738 = vmax.xlane.f32.xlu0 %v737
    %v739 = vpop.xlane.xlu0 %738
    %v740 = vsel %vm244, %v733, -inf
    %741 = vmax.xlane.f32.xlu0 %v740
    %v742 = vpop.xlane.xlu0 %741
    %v743 = vsel %vm244, %v734, -inf
    %744 = vmax.xlane.f32.xlu0 %v743
    %v745 = vpop.xlane.xlu0 %744
    %v746 = vsel %vm244, %v735, -inf
    %747 = vmax.xlane.f32.xlu0 %v746
    %v748 = vpop.xlane.xlu0 %747
    %v749 = vsel %vm244, %v736, -inf
    %750 = vmax.xlane.f32.xlu0 %v749
    %v751 = vpop.xlane.xlu0 %750
    %v752 = vmax.f32 %v739, %v751
    %v753 = vmax.f32 %v752, %v742
    %v754 = vmax.f32 %v745, %v748
    %v755 = vmax.f32 %v753, %v754
    %v756 = vrot.slane %v755, 4
    %v757 = vmax.f32 %v755, %v756
    %v758 = vrot.slane %v757, 2
    %v759 = vmax.f32 %v757, %v758
    %v760 = vrot.slane %v759, 1
    %v761 = vmax.f32 %v759, %v760
    %v762 = vrcp.pop %v761
    %v763 = vmul.f32 1.0, %v762
    %v764 = vadd.f32 %v691, %v763
    %v765 = vrcp.pop %v764
    %v766 = vmul.f32 2.0, %v765
    %v767 = vadd.f32 %v626, %v766
    %vm768 = vcmp.ge.s32.totalorder %v32, 12
    %vm769 = vcmp.ge.s32.totalorder %v230, 12
    %vm770 = vcmp.ge.s32.totalorder %v231, 12
    %vm771 = vcmp.ge.s32.totalorder %v232, 12
    %vm772 = vcmp.ge.s32.totalorder %v233, 12
    %vm773 = vcmp.lt.s32.totalorder %v32, 16
    %vm774 = vcmp.lt.s32.totalorder %v230, 16
    %vm775 = vcmp.lt.s32.totalorder %v231, 16
    %vm776 = vcmp.lt.s32.totalorder %v232, 16
    %vm777 = vcmp.lt.s32.totalorder %v233, 16
    %vm778 = vmand %vm768, %vm773
    %vm779 = vmand %vm769, %vm774
    %vm780 = vmand %vm770, %vm775
    %vm781 = vmand %vm771, %vm776
    %vm782 = vmand %vm772, %vm777
    %vm783 = vcmp.ge.s32.totalorder %v34, 12
    %vm784 = vmand %vm778, %vm783
    %vm785 = vmand %vm779, %vm783
    %vm786 = vmand %vm780, %vm783
    %vm787 = vmand %vm781, %vm783
    %vm788 = vmand %vm782, %vm783
    %vm789 = vcmp.lt.s32.totalorder %v34, 16
    %vm790 = vmand %vm784, %vm789
    %vm791 = vmand %vm785, %vm789
    %vm792 = vmand %vm786, %vm789
    %vm793 = vmand %vm787, %vm789
    %vm794 = vmand %vm788, %vm789
    %vm795 = vmand %vm790, %vm367
    %vm796 = vmand %vm791, %vm368
    %vm797 = vmand %vm792, %vm369
    %vm798 = vmand %vm793, %vm370
    %vm799 = vmand %vm794, %vm371
    %v800 = vsel %vm795, %v296, -1e+30
    %v801 = vsel %vm796, %v303, -1e+30
    %v802 = vsel %vm797, %v310, -1e+30
    %v803 = vsel %vm798, %v317, -1e+30
    %v804 = vsel %vm799, %v324, -1e+30
    %v805 = vsel %vm244, %v800, -inf
    %806 = vmax.xlane.f32.xlu0 %v805
    %v807 = vpop.xlane.xlu0 %806
    %v808 = vsel %vm244, %v801, -inf
    %809 = vmax.xlane.f32.xlu0 %v808
    %v810 = vpop.xlane.xlu0 %809
    %v811 = vsel %vm244, %v802, -inf
    %812 = vmax.xlane.f32.xlu0 %v811
    %v813 = vpop.xlane.xlu0 %812
    %v814 = vsel %vm244, %v803, -inf
    %815 = vmax.xlane.f32.xlu0 %v814
    %v816 = vpop.xlane.xlu0 %815
    %v817 = vsel %vm244, %v804, -inf
    %818 = vmax.xlane.f32.xlu0 %v817
    %v819 = vpop.xlane.xlu0 %818
    %v820 = vmax.f32 %v807, %v819
    %v821 = vmax.f32 %v820, %v810
    %v822 = vmax.f32 %v813, %v816
    %v823 = vmax.f32 %v821, %v822
    %v824 = vrot.slane %v823, 4
    %v825 = vmax.f32 %v823, %v824
    %v826 = vrot.slane %v825, 2
    %v827 = vmax.f32 %v825, %v826
    %v828 = vrot.slane %v827, 1
    %v829 = vmax.f32 %v827, %v828
    %v830 = vrcp.pop %v829
    %v831 = vmul.f32 1.0, %v830
    %v832 = vadd.f32 %v831, 0.0
    %vm833 = vcmp.eq.f32.partialorder %v800, %v829
    %vm834 = vcmp.eq.f32.partialorder %v801, %v829
    %vm835 = vcmp.eq.f32.partialorder %v802, %v829
    %vm836 = vcmp.eq.f32.partialorder %v803, %v829
    %vm837 = vcmp.eq.f32.partialorder %v804, %v829
    %v838 = vsel %vm833, %v335, 1600.0
    %v839 = vsel %vm834, %v336, 1600.0
    %v840 = vsel %vm835, %v337, 1600.0
    %v841 = vsel %vm836, %v338, 1600.0
    %v842 = vsel %vm837, %v339, 1600.0
    %v843 = vsel %vm244, %v838, inf
    %844 = vmin.xlane.f32.xlu0 %v843
    %v845 = vpop.xlane.xlu0 %844
    %v846 = vsel %vm244, %v839, inf
    %847 = vmin.xlane.f32.xlu0 %v846
    %v848 = vpop.xlane.xlu0 %847
    %v849 = vsel %vm244, %v840, inf
    %850 = vmin.xlane.f32.xlu0 %v849
    %v851 = vpop.xlane.xlu0 %850
    %v852 = vsel %vm244, %v841, inf
    %853 = vmin.xlane.f32.xlu0 %v852
    %v854 = vpop.xlane.xlu0 %853
    %v855 = vsel %vm244, %v842, inf
    %856 = vmin.xlane.f32.xlu0 %v855
    %v857 = vpop.xlane.xlu0 %856
    %v858 = vmin.f32 %v845, %v857
    %v859 = vmin.f32 %v858, %v848
    %v860 = vmin.f32 %v851, %v854
    %v861 = vmin.f32 %v859, %v860
    %v862 = vrot.slane %v861, 4
    %v863 = vmin.f32 %v861, %v862
    %v864 = vrot.slane %v863, 2
    %v865 = vmin.f32 %v863, %v864
    %v866 = vrot.slane %v865, 1
    %v867 = vmin.f32 %v865, %v866
    %vm868 = vcmp.eq.f32.partialorder %v335, %v867
    %vm869 = vcmp.eq.f32.partialorder %v336, %v867
    %vm870 = vcmp.eq.f32.partialorder %v337, %v867
    %vm871 = vcmp.eq.f32.partialorder %v338, %v867
    %vm872 = vcmp.eq.f32.partialorder %v339, %v867
    %v873 = vsel %vm868, -1e+30, %v800
    %v874 = vsel %vm869, -1e+30, %v801
    %v875 = vsel %vm870, -1e+30, %v802
    %v876 = vsel %vm871, -1e+30, %v803
    %v877 = vsel %vm872, -1e+30, %v804
    %v878 = vsel %vm244, %v873, -inf
    %879 = vmax.xlane.f32.xlu0 %v878
    %v880 = vpop.xlane.xlu0 %879
    %v881 = vsel %vm244, %v874, -inf
    %882 = vmax.xlane.f32.xlu0 %v881
    %v883 = vpop.xlane.xlu0 %882
    %v884 = vsel %vm244, %v875, -inf
    %885 = vmax.xlane.f32.xlu0 %v884
    %v886 = vpop.xlane.xlu0 %885
    %v887 = vsel %vm244, %v876, -inf
    %888 = vmax.xlane.f32.xlu0 %v887
    %v889 = vpop.xlane.xlu0 %888
    %v890 = vsel %vm244, %v877, -inf
    %891 = vmax.xlane.f32.xlu0 %v890
    %v892 = vpop.xlane.xlu0 %891
    %v893 = vmax.f32 %v880, %v892
    %v894 = vmax.f32 %v893, %v883
    %v895 = vmax.f32 %v886, %v889
    %v896 = vmax.f32 %v894, %v895
    %v897 = vrot.slane %v896, 4
    %v898 = vmax.f32 %v896, %v897
    %v899 = vrot.slane %v898, 2
    %v900 = vmax.f32 %v898, %v899
    %v901 = vrot.slane %v900, 1
    %v902 = vmax.f32 %v900, %v901
    %v903 = vrcp.pop %v902
    %v904 = vmul.f32 1.0, %v903
    %v905 = vadd.f32 %v832, %v904
    %v906 = vrcp.pop %v905
    %v907 = vmul.f32 2.0, %v906
    %v908 = vadd.f32 %v767, %v907
    %vm909 = vcmp.ge.s32.totalorder %v32, 16
    %vm910 = vcmp.ge.s32.totalorder %v230, 16
    %vm911 = vcmp.ge.s32.totalorder %v231, 16
    %vm912 = vcmp.ge.s32.totalorder %v232, 16
    %vm913 = vcmp.ge.s32.totalorder %v233, 16
    %vm914 = vcmp.lt.s32.totalorder %v32, 20
    %vm915 = vcmp.lt.s32.totalorder %v230, 20
    %vm916 = vcmp.lt.s32.totalorder %v231, 20
    %vm917 = vcmp.lt.s32.totalorder %v232, 20
    %vm918 = vcmp.lt.s32.totalorder %v233, 20
    %vm919 = vmand %vm909, %vm914
    %vm920 = vmand %vm910, %vm915
    %vm921 = vmand %vm911, %vm916
    %vm922 = vmand %vm912, %vm917
    %vm923 = vmand %vm913, %vm918
    %vm924 = vcmp.ge.s32.totalorder %v34, 16
    %vm925 = vmand %vm919, %vm924
    %vm926 = vmand %vm920, %vm924
    %vm927 = vmand %vm921, %vm924
    %vm928 = vmand %vm922, %vm924
    %vm929 = vmand %vm923, %vm924
    %vm930 = vcmp.lt.s32.totalorder %v34, 20
    %vm931 = vmand %vm925, %vm930
    %vm932 = vmand %vm926, %vm930
    %vm933 = vmand %vm927, %vm930
    %vm934 = vmand %vm928, %vm930
    %vm935 = vmand %vm929, %vm930
    %vm936 = vmand %vm931, %vm367
    %vm937 = vmand %vm932, %vm368
    %vm938 = vmand %vm933, %vm369
    %vm939 = vmand %vm934, %vm370
    %vm940 = vmand %vm935, %vm371
    %v941 = vsel %vm936, %v296, -1e+30
    %v942 = vsel %vm937, %v303, -1e+30
    %v943 = vsel %vm938, %v310, -1e+30
    %v944 = vsel %vm939, %v317, -1e+30
    %v945 = vsel %vm940, %v324, -1e+30
    %v946 = vsel %vm244, %v941, -inf
    %947 = vmax.xlane.f32.xlu0 %v946
    %v948 = vpop.xlane.xlu0 %947
    %v949 = vsel %vm244, %v942, -inf
    %950 = vmax.xlane.f32.xlu0 %v949
    %v951 = vpop.xlane.xlu0 %950
    %v952 = vsel %vm244, %v943, -inf
    %953 = vmax.xlane.f32.xlu0 %v952
    %v954 = vpop.xlane.xlu0 %953
    %v955 = vsel %vm244, %v944, -inf
    %956 = vmax.xlane.f32.xlu0 %v955
    %v957 = vpop.xlane.xlu0 %956
    %v958 = vsel %vm244, %v945, -inf
    %959 = vmax.xlane.f32.xlu0 %v958
    %v960 = vpop.xlane.xlu0 %959
    %v961 = vmax.f32 %v948, %v960
    %v962 = vmax.f32 %v961, %v951
    %v963 = vmax.f32 %v954, %v957
    %v964 = vmax.f32 %v962, %v963
    %v965 = vrot.slane %v964, 4
    %v966 = vmax.f32 %v964, %v965
    %v967 = vrot.slane %v966, 2
    %v968 = vmax.f32 %v966, %v967
    %v969 = vrot.slane %v968, 1
    %v970 = vmax.f32 %v968, %v969
    %v971 = vrcp.pop %v970
    %v972 = vmul.f32 1.0, %v971
    %v973 = vadd.f32 %v972, 0.0
    %vm974 = vcmp.eq.f32.partialorder %v941, %v970
    %vm975 = vcmp.eq.f32.partialorder %v942, %v970
    %vm976 = vcmp.eq.f32.partialorder %v943, %v970
    %vm977 = vcmp.eq.f32.partialorder %v944, %v970
    %vm978 = vcmp.eq.f32.partialorder %v945, %v970
    %v979 = vsel %vm974, %v335, 1600.0
    %v980 = vsel %vm975, %v336, 1600.0
    %v981 = vsel %vm976, %v337, 1600.0
    %v982 = vsel %vm977, %v338, 1600.0
    %v983 = vsel %vm978, %v339, 1600.0
    %v984 = vsel %vm244, %v979, inf
    %985 = vmin.xlane.f32.xlu0 %v984
    %v986 = vpop.xlane.xlu0 %985
    %v987 = vsel %vm244, %v980, inf
    %988 = vmin.xlane.f32.xlu0 %v987
    %v989 = vpop.xlane.xlu0 %988
    %v990 = vsel %vm244, %v981, inf
    %991 = vmin.xlane.f32.xlu0 %v990
    %v992 = vpop.xlane.xlu0 %991
    %v993 = vsel %vm244, %v982, inf
    %994 = vmin.xlane.f32.xlu0 %v993
    %v995 = vpop.xlane.xlu0 %994
    %v996 = vsel %vm244, %v983, inf
    %997 = vmin.xlane.f32.xlu0 %v996
    %v998 = vpop.xlane.xlu0 %997
    %v999 = vmin.f32 %v986, %v998
    %v1000 = vmin.f32 %v999, %v989
    %v1001 = vmin.f32 %v992, %v995
    %v1002 = vmin.f32 %v1000, %v1001
    %v1003 = vrot.slane %v1002, 4
    %v1004 = vmin.f32 %v1002, %v1003
    %v1005 = vrot.slane %v1004, 2
    %v1006 = vmin.f32 %v1004, %v1005
    %v1007 = vrot.slane %v1006, 1
    %v1008 = vmin.f32 %v1006, %v1007
    %vm1009 = vcmp.eq.f32.partialorder %v335, %v1008
    %vm1010 = vcmp.eq.f32.partialorder %v336, %v1008
    %vm1011 = vcmp.eq.f32.partialorder %v337, %v1008
    %vm1012 = vcmp.eq.f32.partialorder %v338, %v1008
    %vm1013 = vcmp.eq.f32.partialorder %v339, %v1008
    %v1014 = vsel %vm1009, -1e+30, %v941
    %v1015 = vsel %vm1010, -1e+30, %v942
    %v1016 = vsel %vm1011, -1e+30, %v943
    %v1017 = vsel %vm1012, -1e+30, %v944
    %v1018 = vsel %vm1013, -1e+30, %v945
    %v1019 = vsel %vm244, %v1014, -inf
    %1020 = vmax.xlane.f32.xlu0 %v1019
    %v1021 = vpop.xlane.xlu0 %1020
    %v1022 = vsel %vm244, %v1015, -inf
    %1023 = vmax.xlane.f32.xlu0 %v1022
    %v1024 = vpop.xlane.xlu0 %1023
    %v1025 = vsel %vm244, %v1016, -inf
    %1026 = vmax.xlane.f32.xlu0 %v1025
    %v1027 = vpop.xlane.xlu0 %1026
    %v1028 = vsel %vm244, %v1017, -inf
    %1029 = vmax.xlane.f32.xlu0 %v1028
    %v1030 = vpop.xlane.xlu0 %1029
    %v1031 = vsel %vm244, %v1018, -inf
    %1032 = vmax.xlane.f32.xlu0 %v1031
    %v1033 = vpop.xlane.xlu0 %1032
    %v1034 = vmax.f32 %v1021, %v1033
    %v1035 = vmax.f32 %v1034, %v1024
    %v1036 = vmax.f32 %v1027, %v1030
    %v1037 = vmax.f32 %v1035, %v1036
    %v1038 = vrot.slane %v1037, 4
    %v1039 = vmax.f32 %v1037, %v1038
    %v1040 = vrot.slane %v1039, 2
    %v1041 = vmax.f32 %v1039, %v1040
    %v1042 = vrot.slane %v1041, 1
    %v1043 = vmax.f32 %v1041, %v1042
    %v1044 = vrcp.pop %v1043
    %v1045 = vmul.f32 1.0, %v1044
    %v1046 = vadd.f32 %v973, %v1045
    %v1047 = vrcp.pop %v1046
    %v1048 = vmul.f32 2.0, %v1047
    %v1049 = vadd.f32 %v908, %v1048
    %vm1050 = vcmp.ge.s32.totalorder %v32, 20
    %vm1051 = vcmp.ge.s32.totalorder %v230, 20
    %vm1052 = vcmp.ge.s32.totalorder %v231, 20
    %vm1053 = vcmp.ge.s32.totalorder %v232, 20
    %vm1054 = vcmp.ge.s32.totalorder %v233, 20
    %vm1055 = vcmp.lt.s32.totalorder %v32, 24
    %vm1056 = vcmp.lt.s32.totalorder %v230, 24
    %vm1057 = vcmp.lt.s32.totalorder %v231, 24
    %vm1058 = vcmp.lt.s32.totalorder %v232, 24
    %vm1059 = vcmp.lt.s32.totalorder %v233, 24
    %vm1060 = vmand %vm1050, %vm1055
    %vm1061 = vmand %vm1051, %vm1056
    %vm1062 = vmand %vm1052, %vm1057
    %vm1063 = vmand %vm1053, %vm1058
    %vm1064 = vmand %vm1054, %vm1059
    %vm1065 = vcmp.ge.s32.totalorder %v34, 20
    %vm1066 = vmand %vm1060, %vm1065
    %vm1067 = vmand %vm1061, %vm1065
    %vm1068 = vmand %vm1062, %vm1065
    %vm1069 = vmand %vm1063, %vm1065
    %vm1070 = vmand %vm1064, %vm1065
    %vm1071 = vcmp.lt.s32.totalorder %v34, 24
    %vm1072 = vmand %vm1066, %vm1071
    %vm1073 = vmand %vm1067, %vm1071
    %vm1074 = vmand %vm1068, %vm1071
    %vm1075 = vmand %vm1069, %vm1071
    %vm1076 = vmand %vm1070, %vm1071
    %vm1077 = vmand %vm1072, %vm367
    %vm1078 = vmand %vm1073, %vm368
    %vm1079 = vmand %vm1074, %vm369
    %vm1080 = vmand %vm1075, %vm370
    %vm1081 = vmand %vm1076, %vm371
    %v1082 = vsel %vm1077, %v296, -1e+30
    %v1083 = vsel %vm1078, %v303, -1e+30
    %v1084 = vsel %vm1079, %v310, -1e+30
    %v1085 = vsel %vm1080, %v317, -1e+30
    %v1086 = vsel %vm1081, %v324, -1e+30
    %v1087 = vsel %vm244, %v1082, -inf
    %1088 = vmax.xlane.f32.xlu0 %v1087
    %v1089 = vpop.xlane.xlu0 %1088
    %v1090 = vsel %vm244, %v1083, -inf
    %1091 = vmax.xlane.f32.xlu0 %v1090
    %v1092 = vpop.xlane.xlu0 %1091
    %v1093 = vsel %vm244, %v1084, -inf
    %1094 = vmax.xlane.f32.xlu0 %v1093
    %v1095 = vpop.xlane.xlu0 %1094
    %v1096 = vsel %vm244, %v1085, -inf
    %1097 = vmax.xlane.f32.xlu0 %v1096
    %v1098 = vpop.xlane.xlu0 %1097
    %v1099 = vsel %vm244, %v1086, -inf
    %1100 = vmax.xlane.f32.xlu0 %v1099
    %v1101 = vpop.xlane.xlu0 %1100
    %v1102 = vmax.f32 %v1089, %v1101
    %v1103 = vmax.f32 %v1102, %v1092
    %v1104 = vmax.f32 %v1095, %v1098
    %v1105 = vmax.f32 %v1103, %v1104
    %v1106 = vrot.slane %v1105, 4
    %v1107 = vmax.f32 %v1105, %v1106
    %v1108 = vrot.slane %v1107, 2
    %v1109 = vmax.f32 %v1107, %v1108
    %v1110 = vrot.slane %v1109, 1
    %v1111 = vmax.f32 %v1109, %v1110
    %v1112 = vrcp.pop %v1111
    %v1113 = vmul.f32 1.0, %v1112
    %v1114 = vadd.f32 %v1113, 0.0
    %vm1115 = vcmp.eq.f32.partialorder %v1082, %v1111
    %vm1116 = vcmp.eq.f32.partialorder %v1083, %v1111
    %vm1117 = vcmp.eq.f32.partialorder %v1084, %v1111
    %vm1118 = vcmp.eq.f32.partialorder %v1085, %v1111
    %vm1119 = vcmp.eq.f32.partialorder %v1086, %v1111
    %v1120 = vsel %vm1115, %v335, 1600.0
    %v1121 = vsel %vm1116, %v336, 1600.0
    %v1122 = vsel %vm1117, %v337, 1600.0
    %v1123 = vsel %vm1118, %v338, 1600.0
    %v1124 = vsel %vm1119, %v339, 1600.0
    %v1125 = vsel %vm244, %v1120, inf
    %1126 = vmin.xlane.f32.xlu0 %v1125
    %v1127 = vpop.xlane.xlu0 %1126
    %v1128 = vsel %vm244, %v1121, inf
    %1129 = vmin.xlane.f32.xlu0 %v1128
    %v1130 = vpop.xlane.xlu0 %1129
    %v1131 = vsel %vm244, %v1122, inf
    %1132 = vmin.xlane.f32.xlu0 %v1131
    %v1133 = vpop.xlane.xlu0 %1132
    %v1134 = vsel %vm244, %v1123, inf
    %1135 = vmin.xlane.f32.xlu0 %v1134
    %v1136 = vpop.xlane.xlu0 %1135
    %v1137 = vsel %vm244, %v1124, inf
    %1138 = vmin.xlane.f32.xlu0 %v1137
    %v1139 = vpop.xlane.xlu0 %1138
    %v1140 = vmin.f32 %v1127, %v1139
    %v1141 = vmin.f32 %v1140, %v1130
    %v1142 = vmin.f32 %v1133, %v1136
    %v1143 = vmin.f32 %v1141, %v1142
    %v1144 = vrot.slane %v1143, 4
    %v1145 = vmin.f32 %v1143, %v1144
    %v1146 = vrot.slane %v1145, 2
    %v1147 = vmin.f32 %v1145, %v1146
    %v1148 = vrot.slane %v1147, 1
    %v1149 = vmin.f32 %v1147, %v1148
    %vm1150 = vcmp.eq.f32.partialorder %v335, %v1149
    %vm1151 = vcmp.eq.f32.partialorder %v336, %v1149
    %vm1152 = vcmp.eq.f32.partialorder %v337, %v1149
    %vm1153 = vcmp.eq.f32.partialorder %v338, %v1149
    %vm1154 = vcmp.eq.f32.partialorder %v339, %v1149
    %v1155 = vsel %vm1150, -1e+30, %v1082
    %v1156 = vsel %vm1151, -1e+30, %v1083
    %v1157 = vsel %vm1152, -1e+30, %v1084
    %v1158 = vsel %vm1153, -1e+30, %v1085
    %v1159 = vsel %vm1154, -1e+30, %v1086
    %v1160 = vsel %vm244, %v1155, -inf
    %1161 = vmax.xlane.f32.xlu0 %v1160
    %v1162 = vpop.xlane.xlu0 %1161
    %v1163 = vsel %vm244, %v1156, -inf
    %1164 = vmax.xlane.f32.xlu0 %v1163
    %v1165 = vpop.xlane.xlu0 %1164
    %v1166 = vsel %vm244, %v1157, -inf
    %1167 = vmax.xlane.f32.xlu0 %v1166
    %v1168 = vpop.xlane.xlu0 %1167
    %v1169 = vsel %vm244, %v1158, -inf
    %1170 = vmax.xlane.f32.xlu0 %v1169
    %v1171 = vpop.xlane.xlu0 %1170
    %v1172 = vsel %vm244, %v1159, -inf
    %1173 = vmax.xlane.f32.xlu0 %v1172
    %v1174 = vpop.xlane.xlu0 %1173
    %v1175 = vmax.f32 %v1162, %v1174
    %v1176 = vmax.f32 %v1175, %v1165
    %v1177 = vmax.f32 %v1168, %v1171
    %v1178 = vmax.f32 %v1176, %v1177
    %v1179 = vrot.slane %v1178, 4
    %v1180 = vmax.f32 %v1178, %v1179
    %v1181 = vrot.slane %v1180, 2
    %v1182 = vmax.f32 %v1180, %v1181
    %v1183 = vrot.slane %v1182, 1
    %v1184 = vmax.f32 %v1182, %v1183
    %v1185 = vrcp.pop %v1184
    %v1186 = vmul.f32 1.0, %v1185
    %v1187 = vadd.f32 %v1114, %v1186
    %v1188 = vrcp.pop %v1187
    %v1189 = vmul.f32 2.0, %v1188
    %v1190 = vadd.f32 %v1049, %v1189
    %vm1191 = vcmp.ge.s32.totalorder %v32, 24
    %vm1192 = vcmp.ge.s32.totalorder %v230, 24
    %vm1193 = vcmp.ge.s32.totalorder %v231, 24
    %vm1194 = vcmp.ge.s32.totalorder %v232, 24
    %vm1195 = vcmp.ge.s32.totalorder %v233, 24
    %vm1196 = vcmp.lt.s32.totalorder %v32, 28
    %vm1197 = vcmp.lt.s32.totalorder %v230, 28
    %vm1198 = vcmp.lt.s32.totalorder %v231, 28
    %vm1199 = vcmp.lt.s32.totalorder %v232, 28
    %vm1200 = vcmp.lt.s32.totalorder %v233, 28
    %vm1201 = vmand %vm1191, %vm1196
    %vm1202 = vmand %vm1192, %vm1197
    %vm1203 = vmand %vm1193, %vm1198
    %vm1204 = vmand %vm1194, %vm1199
    %vm1205 = vmand %vm1195, %vm1200
    %vm1206 = vcmp.ge.s32.totalorder %v34, 24
    %vm1207 = vmand %vm1201, %vm1206
    %vm1208 = vmand %vm1202, %vm1206
    %vm1209 = vmand %vm1203, %vm1206
    %vm1210 = vmand %vm1204, %vm1206
    %vm1211 = vmand %vm1205, %vm1206
    %vm1212 = vcmp.lt.s32.totalorder %v34, 28
    %vm1213 = vmand %vm1207, %vm1212
    %vm1214 = vmand %vm1208, %vm1212
    %vm1215 = vmand %vm1209, %vm1212
    %vm1216 = vmand %vm1210, %vm1212
    %vm1217 = vmand %vm1211, %vm1212
    %vm1218 = vmand %vm1213, %vm367
    %vm1219 = vmand %vm1214, %vm368
    %vm1220 = vmand %vm1215, %vm369
    %vm1221 = vmand %vm1216, %vm370
    %vm1222 = vmand %vm1217, %vm371
    %v1223 = vsel %vm1218, %v296, -1e+30
    %v1224 = vsel %vm1219, %v303, -1e+30
    %v1225 = vsel %vm1220, %v310, -1e+30
    %v1226 = vsel %vm1221, %v317, -1e+30
    %v1227 = vsel %vm1222, %v324, -1e+30
    %v1228 = vsel %vm244, %v1223, -inf
    %1229 = vmax.xlane.f32.xlu0 %v1228
    %v1230 = vpop.xlane.xlu0 %1229
    %v1231 = vsel %vm244, %v1224, -inf
    %1232 = vmax.xlane.f32.xlu0 %v1231
    %v1233 = vpop.xlane.xlu0 %1232
    %v1234 = vsel %vm244, %v1225, -inf
    %1235 = vmax.xlane.f32.xlu0 %v1234
    %v1236 = vpop.xlane.xlu0 %1235
    %v1237 = vsel %vm244, %v1226, -inf
    %1238 = vmax.xlane.f32.xlu0 %v1237
    %v1239 = vpop.xlane.xlu0 %1238
    %v1240 = vsel %vm244, %v1227, -inf
    %1241 = vmax.xlane.f32.xlu0 %v1240
    %v1242 = vpop.xlane.xlu0 %1241
    %v1243 = vmax.f32 %v1230, %v1242
    %v1244 = vmax.f32 %v1243, %v1233
    %v1245 = vmax.f32 %v1236, %v1239
    %v1246 = vmax.f32 %v1244, %v1245
    %v1247 = vrot.slane %v1246, 4
    %v1248 = vmax.f32 %v1246, %v1247
    %v1249 = vrot.slane %v1248, 2
    %v1250 = vmax.f32 %v1248, %v1249
    %v1251 = vrot.slane %v1250, 1
    %v1252 = vmax.f32 %v1250, %v1251
    %v1253 = vrcp.pop %v1252
    %v1254 = vmul.f32 1.0, %v1253
    %v1255 = vadd.f32 %v1254, 0.0
    %vm1256 = vcmp.eq.f32.partialorder %v1223, %v1252
    %vm1257 = vcmp.eq.f32.partialorder %v1224, %v1252
    %vm1258 = vcmp.eq.f32.partialorder %v1225, %v1252
    %vm1259 = vcmp.eq.f32.partialorder %v1226, %v1252
    %vm1260 = vcmp.eq.f32.partialorder %v1227, %v1252
    %v1261 = vsel %vm1256, %v335, 1600.0
    %v1262 = vsel %vm1257, %v336, 1600.0
    %v1263 = vsel %vm1258, %v337, 1600.0
    %v1264 = vsel %vm1259, %v338, 1600.0
    %v1265 = vsel %vm1260, %v339, 1600.0
    %v1266 = vsel %vm244, %v1261, inf
    %1267 = vmin.xlane.f32.xlu0 %v1266
    %v1268 = vpop.xlane.xlu0 %1267
    %v1269 = vsel %vm244, %v1262, inf
    %1270 = vmin.xlane.f32.xlu0 %v1269
    %v1271 = vpop.xlane.xlu0 %1270
    %v1272 = vsel %vm244, %v1263, inf
    %1273 = vmin.xlane.f32.xlu0 %v1272
    %v1274 = vpop.xlane.xlu0 %1273
    %v1275 = vsel %vm244, %v1264, inf
    %1276 = vmin.xlane.f32.xlu0 %v1275
    %v1277 = vpop.xlane.xlu0 %1276
    %v1278 = vsel %vm244, %v1265, inf
    %1279 = vmin.xlane.f32.xlu0 %v1278
    %v1280 = vpop.xlane.xlu0 %1279
    %v1281 = vmin.f32 %v1268, %v1280
    %v1282 = vmin.f32 %v1281, %v1271
    %v1283 = vmin.f32 %v1274, %v1277
    %v1284 = vmin.f32 %v1282, %v1283
    %v1285 = vrot.slane %v1284, 4
    %v1286 = vmin.f32 %v1284, %v1285
    %v1287 = vrot.slane %v1286, 2
    %v1288 = vmin.f32 %v1286, %v1287
    %v1289 = vrot.slane %v1288, 1
    %v1290 = vmin.f32 %v1288, %v1289
    %vm1291 = vcmp.eq.f32.partialorder %v335, %v1290
    %vm1292 = vcmp.eq.f32.partialorder %v336, %v1290
    %vm1293 = vcmp.eq.f32.partialorder %v337, %v1290
    %vm1294 = vcmp.eq.f32.partialorder %v338, %v1290
    %vm1295 = vcmp.eq.f32.partialorder %v339, %v1290
    %v1296 = vsel %vm1291, -1e+30, %v1223
    %v1297 = vsel %vm1292, -1e+30, %v1224
    %v1298 = vsel %vm1293, -1e+30, %v1225
    %v1299 = vsel %vm1294, -1e+30, %v1226
    %v1300 = vsel %vm1295, -1e+30, %v1227
    %v1301 = vsel %vm244, %v1296, -inf
    %1302 = vmax.xlane.f32.xlu0 %v1301
    %v1303 = vpop.xlane.xlu0 %1302
    %v1304 = vsel %vm244, %v1297, -inf
    %1305 = vmax.xlane.f32.xlu0 %v1304
    %v1306 = vpop.xlane.xlu0 %1305
    %v1307 = vsel %vm244, %v1298, -inf
    %1308 = vmax.xlane.f32.xlu0 %v1307
    %v1309 = vpop.xlane.xlu0 %1308
    %v1310 = vsel %vm244, %v1299, -inf
    %1311 = vmax.xlane.f32.xlu0 %v1310
    %v1312 = vpop.xlane.xlu0 %1311
    %v1313 = vsel %vm244, %v1300, -inf
    %1314 = vmax.xlane.f32.xlu0 %v1313
    %v1315 = vpop.xlane.xlu0 %1314
    %v1316 = vmax.f32 %v1303, %v1315
    %v1317 = vmax.f32 %v1316, %v1306
    %v1318 = vmax.f32 %v1309, %v1312
    %v1319 = vmax.f32 %v1317, %v1318
    %v1320 = vrot.slane %v1319, 4
    %v1321 = vmax.f32 %v1319, %v1320
    %v1322 = vrot.slane %v1321, 2
    %v1323 = vmax.f32 %v1321, %v1322
    %v1324 = vrot.slane %v1323, 1
    %v1325 = vmax.f32 %v1323, %v1324
    %v1326 = vrcp.pop %v1325
    %v1327 = vmul.f32 1.0, %v1326
    %v1328 = vadd.f32 %v1255, %v1327
    %v1329 = vrcp.pop %v1328
    %v1330 = vmul.f32 2.0, %v1329
    %v1331 = vadd.f32 %v1190, %v1330
    %vm1332 = vcmp.ge.s32.totalorder %v32, 28
    %vm1333 = vcmp.ge.s32.totalorder %v230, 28
    %vm1334 = vcmp.ge.s32.totalorder %v231, 28
    %vm1335 = vcmp.ge.s32.totalorder %v232, 28
    %vm1336 = vcmp.ge.s32.totalorder %v233, 28
    %vm1337 = vcmp.lt.s32.totalorder %v32, 32
    %vm1338 = vcmp.lt.s32.totalorder %v230, 32
    %vm1339 = vcmp.lt.s32.totalorder %v231, 32
    %vm1340 = vcmp.lt.s32.totalorder %v232, 32
    %vm1341 = vcmp.lt.s32.totalorder %v233, 32
    %vm1342 = vmand %vm1332, %vm1337
    %vm1343 = vmand %vm1333, %vm1338
    %vm1344 = vmand %vm1334, %vm1339
    %vm1345 = vmand %vm1335, %vm1340
    %vm1346 = vmand %vm1336, %vm1341
    %vm1347 = vcmp.ge.s32.totalorder %v34, 28
    %vm1348 = vmand %vm1342, %vm1347
    %vm1349 = vmand %vm1343, %vm1347
    %vm1350 = vmand %vm1344, %vm1347
    %vm1351 = vmand %vm1345, %vm1347
    %vm1352 = vmand %vm1346, %vm1347
    %vm1353 = vcmp.lt.s32.totalorder %v34, 32
    %vm1354 = vmand %vm1348, %vm1353
    %vm1355 = vmand %vm1349, %vm1353
    %vm1356 = vmand %vm1350, %vm1353
    %vm1357 = vmand %vm1351, %vm1353
    %vm1358 = vmand %vm1352, %vm1353
    %vm1359 = vmand %vm1354, %vm367
    %vm1360 = vmand %vm1355, %vm368
    %vm1361 = vmand %vm1356, %vm369
    %vm1362 = vmand %vm1357, %vm370
    %vm1363 = vmand %vm1358, %vm371
    %v1364 = vsel %vm1359, %v296, -1e+30
    %v1365 = vsel %vm1360, %v303, -1e+30
    %v1366 = vsel %vm1361, %v310, -1e+30
    %v1367 = vsel %vm1362, %v317, -1e+30
    %v1368 = vsel %vm1363, %v324, -1e+30
    %v1369 = vsel %vm244, %v1364, -inf
    %1370 = vmax.xlane.f32.xlu0 %v1369
    %v1371 = vpop.xlane.xlu0 %1370
    %v1372 = vsel %vm244, %v1365, -inf
    %1373 = vmax.xlane.f32.xlu0 %v1372
    %v1374 = vpop.xlane.xlu0 %1373
    %v1375 = vsel %vm244, %v1366, -inf
    %1376 = vmax.xlane.f32.xlu0 %v1375
    %v1377 = vpop.xlane.xlu0 %1376
    %v1378 = vsel %vm244, %v1367, -inf
    %1379 = vmax.xlane.f32.xlu0 %v1378
    %v1380 = vpop.xlane.xlu0 %1379
    %v1381 = vsel %vm244, %v1368, -inf
    %1382 = vmax.xlane.f32.xlu0 %v1381
    %v1383 = vpop.xlane.xlu0 %1382
    %v1384 = vmax.f32 %v1371, %v1383
    %v1385 = vmax.f32 %v1384, %v1374
    %v1386 = vmax.f32 %v1377, %v1380
    %v1387 = vmax.f32 %v1385, %v1386
    %v1388 = vrot.slane %v1387, 4
    %v1389 = vmax.f32 %v1387, %v1388
    %v1390 = vrot.slane %v1389, 2
    %v1391 = vmax.f32 %v1389, %v1390
    %v1392 = vrot.slane %v1391, 1
    %v1393 = vmax.f32 %v1391, %v1392
    %v1394 = vrcp.pop %v1393
    %v1395 = vmul.f32 1.0, %v1394
    %v1396 = vadd.f32 %v1395, 0.0
    %vm1397 = vcmp.eq.f32.partialorder %v1364, %v1393
    %vm1398 = vcmp.eq.f32.partialorder %v1365, %v1393
    %vm1399 = vcmp.eq.f32.partialorder %v1366, %v1393
    %vm1400 = vcmp.eq.f32.partialorder %v1367, %v1393
    %vm1401 = vcmp.eq.f32.partialorder %v1368, %v1393
    %v1402 = vsel %vm1397, %v335, 1600.0
    %v1403 = vsel %vm1398, %v336, 1600.0
    %v1404 = vsel %vm1399, %v337, 1600.0
    %v1405 = vsel %vm1400, %v338, 1600.0
    %v1406 = vsel %vm1401, %v339, 1600.0
    %v1407 = vsel %vm244, %v1402, inf
    %1408 = vmin.xlane.f32.xlu0 %v1407
    %v1409 = vpop.xlane.xlu0 %1408
    %v1410 = vsel %vm244, %v1403, inf
    %1411 = vmin.xlane.f32.xlu0 %v1410
    %v1412 = vpop.xlane.xlu0 %1411
    %v1413 = vsel %vm244, %v1404, inf
    %1414 = vmin.xlane.f32.xlu0 %v1413
    %v1415 = vpop.xlane.xlu0 %1414
    %v1416 = vsel %vm244, %v1405, inf
    %1417 = vmin.xlane.f32.xlu0 %v1416
    %v1418 = vpop.xlane.xlu0 %1417
    %v1419 = vsel %vm244, %v1406, inf
    %1420 = vmin.xlane.f32.xlu0 %v1419
    %v1421 = vpop.xlane.xlu0 %1420
    %v1422 = vmin.f32 %v1409, %v1421
    %v1423 = vmin.f32 %v1422, %v1412
    %v1424 = vmin.f32 %v1415, %v1418
    %v1425 = vmin.f32 %v1423, %v1424
    %v1426 = vrot.slane %v1425, 4
    %v1427 = vmin.f32 %v1425, %v1426
    %v1428 = vrot.slane %v1427, 2
    %v1429 = vmin.f32 %v1427, %v1428
    %v1430 = vrot.slane %v1429, 1
    %v1431 = vmin.f32 %v1429, %v1430
    %vm1432 = vcmp.eq.f32.partialorder %v335, %v1431
    %vm1433 = vcmp.eq.f32.partialorder %v336, %v1431
    %vm1434 = vcmp.eq.f32.partialorder %v337, %v1431
    %vm1435 = vcmp.eq.f32.partialorder %v338, %v1431
    %vm1436 = vcmp.eq.f32.partialorder %v339, %v1431
    %v1437 = vsel %vm1432, -1e+30, %v1364
    %v1438 = vsel %vm1433, -1e+30, %v1365
    %v1439 = vsel %vm1434, -1e+30, %v1366
    %v1440 = vsel %vm1435, -1e+30, %v1367
    %v1441 = vsel %vm1436, -1e+30, %v1368
    %v1442 = vsel %vm244, %v1437, -inf
    %1443 = vmax.xlane.f32.xlu0 %v1442
    %v1444 = vpop.xlane.xlu0 %1443
    %v1445 = vsel %vm244, %v1438, -inf
    %1446 = vmax.xlane.f32.xlu0 %v1445
    %v1447 = vpop.xlane.xlu0 %1446
    %v1448 = vsel %vm244, %v1439, -inf
    %1449 = vmax.xlane.f32.xlu0 %v1448
    %v1450 = vpop.xlane.xlu0 %1449
    %v1451 = vsel %vm244, %v1440, -inf
    %1452 = vmax.xlane.f32.xlu0 %v1451
    %v1453 = vpop.xlane.xlu0 %1452
    %v1454 = vsel %vm244, %v1441, -inf
    %1455 = vmax.xlane.f32.xlu0 %v1454
    %v1456 = vpop.xlane.xlu0 %1455
    %v1457 = vmax.f32 %v1444, %v1456
    %v1458 = vmax.f32 %v1457, %v1447
    %v1459 = vmax.f32 %v1450, %v1453
    %v1460 = vmax.f32 %v1458, %v1459
    %v1461 = vrot.slane %v1460, 4
    %v1462 = vmax.f32 %v1460, %v1461
    %v1463 = vrot.slane %v1462, 2
    %v1464 = vmax.f32 %v1462, %v1463
    %v1465 = vrot.slane %v1464, 1
    %v1466 = vmax.f32 %v1464, %v1465
    %v1467 = vrcp.pop %v1466
    %v1468 = vmul.f32 1.0, %v1467
    %v1469 = vadd.f32 %v1396, %v1468
    %v1470 = vrcp.pop %v1469
    %v1471 = vmul.f32 2.0, %v1470
    %v1472 = vadd.f32 %v1331, %v1471
    %vm1473 = vcmp.ge.s32.totalorder %v32, 32
    %vm1474 = vcmp.ge.s32.totalorder %v230, 32
    %vm1475 = vcmp.ge.s32.totalorder %v231, 32
    %vm1476 = vcmp.ge.s32.totalorder %v232, 32
    %vm1477 = vcmp.ge.s32.totalorder %v233, 32
    %vm1478 = vcmp.ge.s32.totalorder %v34, 32
    %vm1479 = vmand %vm1473, %vm1478
    %vm1480 = vmand %vm1474, %vm1478
    %vm1481 = vmand %vm1475, %vm1478
    %vm1482 = vmand %vm1476, %vm1478
    %vm1483 = vmand %vm1477, %vm1478
    %vm1484 = vcmp.ne.s32.totalorder %v32, %v34
    %vm1485 = vcmp.ne.s32.totalorder %v230, %v34
    %vm1486 = vcmp.ne.s32.totalorder %v231, %v34
    %vm1487 = vcmp.ne.s32.totalorder %v232, %v34
    %vm1488 = vcmp.ne.s32.totalorder %v233, %v34
    %vm1489 = vmand %vm1479, %vm1484
    %vm1490 = vmand %vm1480, %vm1485
    %vm1491 = vmand %vm1481, %vm1486
    %vm1492 = vmand %vm1482, %vm1487
    %vm1493 = vmand %vm1483, %vm1488
    %v1494 = vsel %vm1489, %v296, 1e+30
    %v1495 = vsel %vm1490, %v303, 1e+30
    %v1496 = vsel %vm1491, %v310, 1e+30
    %v1497 = vsel %vm1492, %v317, 1e+30
    %v1498 = vsel %vm1493, %v324, 1e+30
    %v1499 = vsel %vm244, %v1494, inf
    %1500 = vmin.xlane.f32.xlu0 %v1499
    %v1501 = vpop.xlane.xlu0 %1500
    %v1502 = vsel %vm244, %v1495, inf
    %1503 = vmin.xlane.f32.xlu0 %v1502
    %v1504 = vpop.xlane.xlu0 %1503
    %v1505 = vsel %vm244, %v1496, inf
    %1506 = vmin.xlane.f32.xlu0 %v1505
    %v1507 = vpop.xlane.xlu0 %1506
    %v1508 = vsel %vm244, %v1497, inf
    %1509 = vmin.xlane.f32.xlu0 %v1508
    %v1510 = vpop.xlane.xlu0 %1509
    %v1511 = vsel %vm244, %v1498, inf
    %1512 = vmin.xlane.f32.xlu0 %v1511
    %v1513 = vpop.xlane.xlu0 %1512
    %v1514 = vmin.f32 %v1501, %v1513
    %v1515 = vmin.f32 %v1514, %v1504
    %v1516 = vmin.f32 %v1507, %v1510
    %v1517 = vmin.f32 %v1515, %v1516
    %v1518 = vrot.slane %v1517, 4
    %v1519 = vmin.f32 %v1517, %v1518
    %v1520 = vrot.slane %v1519, 2
    %v1521 = vmin.f32 %v1519, %v1520
    %v1522 = vrot.slane %v1521, 1
    %v1523 = vmin.f32 %v1521, %v1522
    %v1524 = vsub.f32 0.1, %v1523
    %v1525 = vmax.f32 %v1524, 0.0
    %vm1526 = vcmask 0
    %1527 = vst.msk [vmem:[#allocation6] sm:$0x1] %vm1526, %v1525
    %1528 = vst.msk [vmem:[#allocation7] sm:$0x1] %vm1526, %v1472
    %v1529 = vmul.f32 %v1472, 0.5
    %v1530 = vmul.f32 %v1525, 0.5
    %v1531 = vadd.f32 %v1529, %v1530
    %1532 = vst.msk [vmem:[#allocation9] sm:$0x1] %vm1526, %v1531
    // Predicated region
    $region10: #{tpu_custom_call.1} parent=1 // pred_check
      _
    $region11: #{tpu_custom_call.1} parent=1 // pred_check_branch
      %1534 = sbr.rel (0) target = $region13
    $region12: #{tpu_custom_call.1} parent=1 // pred_region
      %s1536 = ssub.s32 16, 16
      %1537 = vsyncadd [#allocation5], %s1536
      %s1539 = sshll.u32 [#allocation6], 4
      %s1540 = int_to_ptr.vmem [resolvable:$true] %s1539
      %1542 = dma.vmem_to_hbm [thread:$0]  %s1540, 16, %s1, [#allocation5]
    $region13: #{tpu_custom_call.1} parent=1 // pred_fallthru
      _
    // Predicated region
    $region14: #{tpu_custom_call.1} parent=1 // pred_check
      _
    $region15: #{tpu_custom_call.1} parent=1 // pred_check_branch
      %1544 = sbr.rel (0) target = $region17
    $region16: #{tpu_custom_call.1} parent=1 // pred_region
      %s1546 = ssub.s32 16, 16
      %1547 = vsyncadd [#allocation8], %s1546
      %s1549 = sshll.u32 [#allocation7], 4
      %s1550 = int_to_ptr.vmem [resolvable:$true] %s1549
      %1552 = dma.vmem_to_hbm [thread:$0]  %s1550, 16, %s2, [#allocation8]
    $region17: #{tpu_custom_call.1} parent=1 // pred_fallthru
      _
    // Predicated region
    $region18: #{tpu_custom_call.1} parent=1 // pred_check
      _
    $region19: #{tpu_custom_call.1} parent=1 // pred_check_branch
      %1554 = sbr.rel (0) target = $region21
    $region20: #{tpu_custom_call.1} parent=1 // pred_region
      %s1556 = ssub.s32 16, 16
      %1557 = vsyncadd [#allocation8], %s1556
      %s1559 = sshll.u32 [#allocation9], 4
      %s1560 = int_to_ptr.vmem [resolvable:$true] %s1559
      %1562 = dma.vmem_to_hbm [thread:$0]  %s1560, 16, %s3, [#allocation8]
    $region21: #{tpu_custom_call.1} parent=1 // pred_fallthru
      _
    // Predicated region
    $region22: #{tpu_custom_call.1} parent=1 // pred_check
      _
    $region23: #{tpu_custom_call.1} parent=1 // pred_check_branch
      %1564 = sbr.rel (0) target = $region25
    $region24: #{tpu_custom_call.1} parent=1 // pred_region
      %1565 = dma.done [#allocation5], 16
    $region25: #{tpu_custom_call.1} parent=1 // pred_fallthru
      _
    // Predicated region
    $region26: #{tpu_custom_call.1} parent=1 // pred_check
      _
    $region27: #{tpu_custom_call.1} parent=1 // pred_check_branch
      %1567 = sbr.rel (0) target = $region29
    $region28: #{tpu_custom_call.1} parent=1 // pred_region
      %1568 = dma.done [#allocation8], 16
    $region29: #{tpu_custom_call.1} parent=1 // pred_fallthru
      _
    // Predicated region
    $region30: #{tpu_custom_call.1} parent=1 // pred_check
      _
    $region31: #{tpu_custom_call.1} parent=1 // pred_check_branch
      %1570 = sbr.rel (0) target = $region33
    $region32: #{tpu_custom_call.1} parent=1 // pred_region
      %1571 = dma.done [#allocation8], 16
    $region33: #{tpu_custom_call.1} parent=1 // pred_fallthru
      _
    %1572 = vsyncpa [#allocation4], 1
    %1573 = vsyncpa [#allocation5], 1
    %1574 = vsyncpa [#allocation8], 1

</llo_original>
